<compile_context>
chip_gen: v7x
topology: tpu7x:2x2x1
jax: 0.10.0
libtpu: 0.0.40
codegen_flags: <defaults>
</compile_context>

<pallas_src>
import math

import jax
import jax.numpy as jnp
from jax.experimental import pallas as pl
from jax.experimental.pallas import tpu as pltpu

# --- small synthetic "roberta" config -----------------------------------------------
B = 2          # batch
S = 8          # sequence length
H = 32         # hidden size
NH = 2         # attention heads
HD = H // NH   # head dim
FFN = 64       # intermediate size
VOCAB = 100
N_LAYERS = 2
LN_EPS = 1e-6  # config.layer_norm_eps = 1e-6 (as in __init__)
BS = B * S


def _layer_norm(x, gamma, beta):
    mu = jnp.mean(x, axis=-1, keepdims=True)
    var = jnp.mean(jnp.square(x - mu), axis=-1, keepdims=True)
    return (x - mu) * jax.lax.rsqrt(var + LN_EPS) * gamma + beta


# --- single fused kernel: N_LAYERS encoder layers + token head + masked BCE loss -----
def nbme_fused_kernel(x_ref, mask_ref, t_ref,
                      wqkv_ref, bqkv_ref, wo_ref,
                      w1_ref, b1_ref, w2_ref,
                      vecs_ref,                 # (L, 6, H): bo, b2, ln1g, ln1b, ln2g, ln2b
                      wout_ref, bout_ref,
                      probs_ref, loss_ref,
                      ctx_ref):                 # VMEM scratch (B*S, H) for head-concat
    f32 = jnp.float32
    x = x_ref[...]                              # (B*S, H) activation slab, f32
    add_mask = mask_ref[...]                    # (B*S, B*S) additive mask (block-diag + key pad)

    for l in range(N_LAYERS):                   # static unroll; all weights resident in VMEM
        # One fused QKV projection for the whole slab.
        # Column layout: [Q_h0 | Q_h1 | K_h0 | K_h1 | V_h0 | V_h1], 1/sqrt(HD) folded into Q.
        qkv = jnp.dot(x, wqkv_ref[l], preferred_element_type=f32) + bqkv_ref[l]   # (B*S, 3H)
        vecs = vecs_ref[l]                      # (6, H)

        for h in range(NH):                     # static unroll (NH=2); static 16-lane slices
            q = qkv[:, h * HD:(h + 1) * HD]                       # (B*S, HD)
            k = qkv[:, (NH + h) * HD:(NH + h + 1) * HD]
            v = qkv[:, (2 * NH + h) * HD:(2 * NH + h + 1) * HD]
            scores = jnp.einsum('qd,kd->qk', q, k,
                                preferred_element_type=f32) + add_mask            # (B*S, B*S)
            m = jnp.max(scores, axis=-1, keepdims=True)
            e = jnp.exp(scores - m)
            p = e * pl.reciprocal(jnp.sum(e, axis=-1, keepdims=True), approx=True)
            # head context written into its 16-lane column block of the scratch
            ctx_ref[:, h * HD:(h + 1) * HD] = jnp.dot(p, v, preferred_element_type=f32)

        # single output projection over all heads (ctx scratch already head-concatenated)
        attn = jnp.dot(ctx_ref[...], wo_ref[l], preferred_element_type=f32) + vecs[0:1, :]
        x = _layer_norm(x + attn, vecs[2:3, :], vecs[3:4, :])

        hdn = jnp.dot(x, w1_ref[l], preferred_element_type=f32) + b1_ref[l]
        # TODO(synk): HF roberta uses exact erf-GELU; tanh approximation used for lowering.
        hdn = jax.nn.gelu(hdn, approximate=True)
        ffn = jnp.dot(hdn, w2_ref[l], preferred_element_type=f32) + vecs[1:2, :]
        x = _layer_norm(x + ffn, vecs[4:5, :], vecs[5:6, :])

    # --- multi-sample-dropout head (eval mode: the 5 branches are identical, so
    #     mean(logits1..5) == logits and mean(loss1..5) == loss) --------------------
    # nn.Linear(H, 1) as VPU multiply + lane reduction (no 1-row MXU matmul).
    logits = jnp.sum(x * wout_ref[...], axis=-1, keepdims=True) + bout_ref[...]   # (B*S, 1)
    probs_ref[...] = jax.nn.sigmoid(logits)

    # nn.BCEWithLogitsLoss(reduction='none') + masked_select(target != -100).mean()
    t = t_ref[...]                                                                # (B*S, 1)
    per_tok = (jnp.maximum(logits, 0.0) - logits * t
               + jnp.log1p(jnp.exp(-jnp.abs(logits))))
    valid = (t != -100.0).astype(f32)
    total = jnp.sum(per_tok * valid)
    count = jnp.sum(valid)
    loss_ref[...] = jnp.broadcast_to(total / jnp.maximum(count, 1.0), (1, 1))


# --- parameter init (deterministic, synthetic "pretrained" weights) -------------------
def init_params(key):
    def nrm(k, shape, scale=0.02):
        return scale * jax.random.normal(k, shape, jnp.float32)

    keys = iter(jax.random.split(key, 64))
    params = {}
    params['embed'] = (nrm(next(keys), (VOCAB, H)),          # word embeddings
                       nrm(next(keys), (S, H)),              # position embeddings
                       jnp.ones((1, H), jnp.float32),        # emb LN gamma
                       jnp.zeros((1, H), jnp.float32))       # emb LN beta

    attn_scale = 1.0 / math.sqrt(HD)
    wqkv_l, bqkv_l, wo_l, w1_l, b1_l, w2_l, vecs_l = [], [], [], [], [], [], []
    for _ in range(N_LAYERS):
        wq = nrm(next(keys), (H, H)); wk = nrm(next(keys), (H, H)); wv = nrm(next(keys), (H, H))
        bq = nrm(next(keys), (H,), 0.01); bk = nrm(next(keys), (H,), 0.01)
        bv = nrm(next(keys), (H,), 0.01)
        wo = nrm(next(keys), (H, H)); bo = nrm(next(keys), (H,), 0.01)
        w1 = nrm(next(keys), (H, FFN)); b1 = nrm(next(keys), (FFN,), 0.01)
        w2 = nrm(next(keys), (FFN, H)); b2 = nrm(next(keys), (H,), 0.01)

        # Fused QKV slab; softmax scale folded into BOTH the Q weight columns and Q bias
        # (so real pretrained biases load correctly through this path).
        wqkv_l.append(jnp.concatenate([wq * attn_scale, wk, wv], axis=1))        # (H, 3H)
        bqkv_l.append(jnp.concatenate([bq * attn_scale, bk, bv]).reshape(1, 3 * H))
        wo_l.append(wo)                                                          # (H, H)
        w1_l.append(w1); b1_l.append(b1.reshape(1, FFN)); w2_l.append(w2)
        vecs_l.append(jnp.stack([bo, b2,
                                 jnp.ones((H,), jnp.float32), jnp.zeros((H,), jnp.float32),
                                 jnp.ones((H,), jnp.float32), jnp.zeros((H,), jnp.float32)],
                                axis=0))                                          # (6, H)

    params['wqkv'] = jnp.stack(wqkv_l)        # (L, H, 3H)
    params['bqkv'] = jnp.stack(bqkv_l)        # (L, 1, 3H)
    params['wo'] = jnp.stack(wo_l)            # (L, H, H)
    params['w1'] = jnp.stack(w1_l)            # (L, H, FFN)
    params['b1'] = jnp.stack(b1_l)            # (L, 1, FFN)
    params['w2'] = jnp.stack(w2_l)            # (L, FFN, H)
    params['vecs'] = jnp.stack(vecs_l)        # (L, 6, H)
    params['w_out'] = nrm(next(keys), (1, H))            # self.output = nn.Linear(H, 1)
    params['b_out'] = jnp.zeros((1, 1), jnp.float32)
    return params


# --- glue: embeddings (plain JAX) + one fused Pallas call ------------------------------
def embed(ids, embed_params):
    # TODO(synk): embedding gather stays in plain JAX; a Pallas gather buys nothing here.
    we, pe, g, b = embed_params
    x = we[ids] + pe[None, :, :]                   # (B, S, H)
    return _layer_norm(x, g, b)


@jax.jit
def nbme_forward(params, input_ids, attention_mask, targets):
    x2d = embed(input_ids, params['embed']).reshape(BS, H).astype(jnp.float32)

    # Precomputed (B*S, B*S) additive attention mask: cross-batch pairs and padded keys
    # get -1e9, everything else 0.  Built once in the wrapper (no in-kernel broadcasts).
    am = attention_mask.astype(jnp.float32).reshape(BS)
    key_bias = (am - 1.0) * 1e9                                   # 0 keep, -1e9 pad
    batch_of = jnp.arange(BS) // S
    same_batch = batch_of[:, None] == batch_of[None, :]
    add_mask = jnp.where(same_batch, key_bias[None, :], -1e9)     # (B*S, B*S)

    targets_col = targets.reshape(BS, 1).astype(jnp.float32)

    ops = (x2d, add_mask, targets_col,
           params['wqkv'], params['bqkv'], params['wo'],
           params['w1'], params['b1'], params['w2'], params['vecs'],
           params['w_out'], params['b_out'])
    vmem = lambda: pl.BlockSpec(memory_space=pltpu.MemorySpace.VMEM)

    probs_col, loss = pl.pallas_call(
        nbme_fused_kernel,
        out_shape=(jax.ShapeDtypeStruct((BS, 1), jnp.float32),
                   jax.ShapeDtypeStruct((1, 1), jnp.float32)),
        in_specs=[vmem() for _ in ops],
        out_specs=(vmem(), vmem()),
        scratch_shapes=[pltpu.VMEM((BS, H), jnp.float32)],
    )(*ops)

    probs = probs_col.reshape(B, S, 1)
    # ret = {'logits': sigmoid(mean logits), 'loss': masked BCE, 'target': targets}
    return {'logits': probs, 'loss': loss[0, 0], 'target': targets}


if __name__ == "__main__":
    key = jax.random.PRNGKey(0)
    kp, kid, kt = jax.random.split(key, 3)
    params = init_params(kp)

    input_ids = jax.random.randint(kid, (B, S), 0, VOCAB, dtype=jnp.int32)
    attention_mask = jnp.array([[1, 1, 1, 1, 1, 1, 0, 0],
                                [1, 1, 1, 1, 1, 1, 1, 1]], dtype=jnp.int32)
    targets = jax.random.bernoulli(kt, 0.3, (B, S, 1)).astype(jnp.float32)
    # mark padded positions as ignored (-100), like the original pipeline
    targets = jnp.where(attention_mask[:, :, None] == 1, targets, -100.0)

    out = nbme_forward(params, input_ids, attention_mask, targets)
    jax.block_until_ready(out)

    assert out['logits'].shape == (B, S, 1)
    assert jnp.all((out['logits'] >= 0.0) & (out['logits'] <= 1.0))
    assert jnp.isfinite(out['loss'])
    print("KERNEL_OK")
</pallas_src>

<mosaic_0001>
module attributes {stable_mosaic.version = 11 : i64} {
  func.func @nbme_fused_kernel(%arg0: memref<16x32xf32, #tpu.memory_space<vmem>>, %arg1: memref<16x16xf32, #tpu.memory_space<vmem>>, %arg2: memref<16x1xf32, #tpu.memory_space<vmem>>, %arg3: memref<2x32x96xf32, #tpu.memory_space<vmem>>, %arg4: memref<2x1x96xf32, #tpu.memory_space<vmem>>, %arg5: memref<2x32x32xf32, #tpu.memory_space<vmem>>, %arg6: memref<2x32x64xf32, #tpu.memory_space<vmem>>, %arg7: memref<2x1x64xf32, #tpu.memory_space<vmem>>, %arg8: memref<2x64x32xf32, #tpu.memory_space<vmem>>, %arg9: memref<2x6x32xf32, #tpu.memory_space<vmem>>, %arg10: memref<1x32xf32, #tpu.memory_space<vmem>>, %arg11: memref<1x1xf32, #tpu.memory_space<vmem>>, %arg12: memref<16x1xf32, #tpu.memory_space<vmem>>, %arg13: memref<1x1xf32, #tpu.memory_space<vmem>>, %arg14: memref<16x32xf32, #tpu.memory_space<vmem>>) attributes {dimension_semantics = [], scalar_prefetch = 0 : i64, scratch_operands = 1 : i64, tpu.core_type = #tpu.core_type<tc>} {
    %c0 = arith.constant 0 : index
    %c0_0 = arith.constant 0 : index
    %0 = vector.load %arg0[%c0, %c0_0] : memref<16x32xf32, #tpu.memory_space<vmem>>, vector<16x32xf32>
    %c0_1 = arith.constant 0 : index
    %c0_2 = arith.constant 0 : index
    %1 = vector.load %arg1[%c0_1, %c0_2] : memref<16x16xf32, #tpu.memory_space<vmem>>, vector<16x16xf32>
    %c0_3 = arith.constant 0 : index
    %c0_4 = arith.constant 0 : index
    %c0_5 = arith.constant 0 : index
    %2 = vector.load %arg3[%c0_3, %c0_4, %c0_5] : memref<2x32x96xf32, #tpu.memory_space<vmem>>, vector<1x32x96xf32>
    %3 = vector.shape_cast %2 : vector<1x32x96xf32> to vector<32x96xf32>
    %cst = arith.constant dense<0.000000e+00> : vector<16x96xf32>
    %4 = tpu.matmul %0, %3, %cst {dimension_numbers = #tpu.dot_dimension_numbers<[1], [0], [0], [1], [0, 0, 1, 1], [], []>} : vector<16x32xf32>, vector<32x96xf32>, vector<16x96xf32> -> vector<16x96xf32>
    %c0_6 = arith.constant 0 : index
    %c0_7 = arith.constant 0 : index
    %c0_8 = arith.constant 0 : index
    %5 = vector.load %arg4[%c0_6, %c0_7, %c0_8] : memref<2x1x96xf32, #tpu.memory_space<vmem>>, vector<1x1x96xf32>
    %6 = vector.shape_cast %5 : vector<1x1x96xf32> to vector<1x96xf32>
    %7 = vector.broadcast %6 : vector<1x96xf32> to vector<16x96xf32>
    %8 = arith.addf %4, %7 : vector<16x96xf32>
    %c0_9 = arith.constant 0 : index
    %c0_10 = arith.constant 0 : index
    %c0_11 = arith.constant 0 : index
    %9 = vector.load %arg9[%c0_9, %c0_10, %c0_11] : memref<2x6x32xf32, #tpu.memory_space<vmem>>, vector<1x6x32xf32>
    %10 = vector.shape_cast %9 : vector<1x6x32xf32> to vector<6x32xf32>
    %11 = vector.extract_strided_slice %8 {offsets = [0, 0], sizes = [16, 16], strides = [1, 1]} : vector<16x96xf32> to vector<16x16xf32>
    %12 = vector.extract_strided_slice %8 {offsets = [0, 32], sizes = [16, 16], strides = [1, 1]} : vector<16x96xf32> to vector<16x16xf32>
    %13 = vector.extract_strided_slice %8 {offsets = [0, 64], sizes = [16, 16], strides = [1, 1]} : vector<16x96xf32> to vector<16x16xf32>
    "tpu.trace_start"() <{level = 10 : i32, message = "qd,kd->qk"}> : () -> ()
    %cst_12 = arith.constant dense<0.000000e+00> : vector<16x16xf32>
    %14 = tpu.matmul %11, %12, %cst_12 {dimension_numbers = #tpu.dot_dimension_numbers<[1], [1], [0], [0], [0, 0, 1, 0], [], []>} : vector<16x16xf32>, vector<16x16xf32>, vector<16x16xf32> -> vector<16x16xf32>
    "tpu.trace_stop"() : () -> ()
    %15 = arith.addf %14, %1 : vector<16x16xf32>
    %cst_13 = arith.constant dense<0xFF800000> : vector<16xf32>
    %16 = vector.multi_reduction <maximumf>, %15, %cst_13 [1] : vector<16x16xf32> to vector<16xf32>
    %17 = vector.shape_cast %16 : vector<16xf32> to vector<16x1xf32>
    %18 = vector.broadcast %17 : vector<16x1xf32> to vector<16x16xf32>
    %19 = arith.subf %15, %18 : vector<16x16xf32>
    %20 = math.exp %19 : vector<16x16xf32>
    %cst_14 = arith.constant dense<0.000000e+00> : vector<16xf32>
    %21 = vector.multi_reduction <add>, %20, %cst_14 [1] : vector<16x16xf32> to vector<16xf32>
    %22 = vector.shape_cast %21 : vector<16xf32> to vector<16x1xf32>
    %23 = tpu.reciprocal %22 {approx = true} : vector<16x1xf32> -> vector<16x1xf32>
    %24 = vector.broadcast %23 : vector<16x1xf32> to vector<16x16xf32>
    %25 = arith.mulf %20, %24 : vector<16x16xf32>
    %cst_15 = arith.constant dense<0.000000e+00> : vector<16x16xf32>
    %26 = tpu.matmul %25, %13, %cst_15 {dimension_numbers = #tpu.dot_dimension_numbers<[1], [0], [0], [1], [0, 0, 1, 1], [], []>} : vector<16x16xf32>, vector<16x16xf32>, vector<16x16xf32> -> vector<16x16xf32>
    %c0_16 = arith.constant 0 : index
    %c0_17 = arith.constant 0 : index
    %27 = vector.load %arg14[%c0_16, %c0_17] : memref<16x32xf32, #tpu.memory_space<vmem>>, vector<16x16xf32>
    tpu.vector_store %arg14[%c0_16, %c0_17], %26 {strides = array<i32>} : memref<16x32xf32, #tpu.memory_space<vmem>>, vector<16x16xf32>,
    %28 = vector.extract_strided_slice %8 {offsets = [0, 16], sizes = [16, 16], strides = [1, 1]} : vector<16x96xf32> to vector<16x16xf32>
    %29 = vector.extract_strided_slice %8 {offsets = [0, 48], sizes = [16, 16], strides = [1, 1]} : vector<16x96xf32> to vector<16x16xf32>
    %30 = vector.extract_strided_slice %8 {offsets = [0, 80], sizes = [16, 16], strides = [1, 1]} : vector<16x96xf32> to vector<16x16xf32>
    "tpu.trace_start"() <{level = 10 : i32, message = "qd,kd->qk"}> : () -> ()
    %cst_18 = arith.constant dense<0.000000e+00> : vector<16x16xf32>
    %31 = tpu.matmul %28, %29, %cst_18 {dimension_numbers = #tpu.dot_dimension_numbers<[1], [1], [0], [0], [0, 0, 1, 0], [], []>} : vector<16x16xf32>, vector<16x16xf32>, vector<16x16xf32> -> vector<16x16xf32>
    "tpu.trace_stop"() : () -> ()
    %32 = arith.addf %31, %1 : vector<16x16xf32>
    %cst_19 = arith.constant dense<0xFF800000> : vector<16xf32>
    %33 = vector.multi_reduction <maximumf>, %32, %cst_19 [1] : vector<16x16xf32> to vector<16xf32>
    %34 = vector.shape_cast %33 : vector<16xf32> to vector<16x1xf32>
    %35 = vector.broadcast %34 : vector<16x1xf32> to vector<16x16xf32>
    %36 = arith.subf %32, %35 : vector<16x16xf32>
    %37 = math.exp %36 : vector<16x16xf32>
    %cst_20 = arith.constant dense<0.000000e+00> : vector<16xf32>
    %38 = vector.multi_reduction <add>, %37, %cst_20 [1] : vector<16x16xf32> to vector<16xf32>
    %39 = vector.shape_cast %38 : vector<16xf32> to vector<16x1xf32>
    %40 = tpu.reciprocal %39 {approx = true} : vector<16x1xf32> -> vector<16x1xf32>
    %41 = vector.broadcast %40 : vector<16x1xf32> to vector<16x16xf32>
    %42 = arith.mulf %37, %41 : vector<16x16xf32>
    %cst_21 = arith.constant dense<0.000000e+00> : vector<16x16xf32>
    %43 = tpu.matmul %42, %30, %cst_21 {dimension_numbers = #tpu.dot_dimension_numbers<[1], [0], [0], [1], [0, 0, 1, 1], [], []>} : vector<16x16xf32>, vector<16x16xf32>, vector<16x16xf32> -> vector<16x16xf32>
    %c0_22 = arith.constant 0 : index
    %c16 = arith.constant 16 : index
    %44 = vector.load %arg14[%c0_22, %c16] : memref<16x32xf32, #tpu.memory_space<vmem>>, vector<16x16xf32>
    tpu.vector_store %arg14[%c0_22, %c16], %43 {strides = array<i32>} : memref<16x32xf32, #tpu.memory_space<vmem>>, vector<16x16xf32>,
    %c0_23 = arith.constant 0 : index
    %c0_24 = arith.constant 0 : index
    %45 = vector.load %arg14[%c0_23, %c0_24] : memref<16x32xf32, #tpu.memory_space<vmem>>, vector<16x32xf32>
    %c0_25 = arith.constant 0 : index
    %c0_26 = arith.constant 0 : index
    %c0_27 = arith.constant 0 : index
    %46 = vector.load %arg5[%c0_25, %c0_26, %c0_27] : memref<2x32x32xf32, #tpu.memory_space<vmem>>, vector<1x32x32xf32>
    %47 = vector.shape_cast %46 : vector<1x32x32xf32> to vector<32x32xf32>
    %cst_28 = arith.constant dense<0.000000e+00> : vector<16x32xf32>
    %48 = tpu.matmul %45, %47, %cst_28 {dimension_numbers = #tpu.dot_dimension_numbers<[1], [0], [0], [1], [0, 0, 1, 1], [], []>} : vector<16x32xf32>, vector<32x32xf32>, vector<16x32xf32> -> vector<16x32xf32>
    %49 = vector.extract_strided_slice %10 {offsets = [0, 0], sizes = [1, 32], strides = [1, 1]} : vector<6x32xf32> to vector<1x32xf32>
    %50 = vector.broadcast %49 : vector<1x32xf32> to vector<16x32xf32>
    %51 = arith.addf %48, %50 : vector<16x32xf32>
    %52 = arith.addf %0, %51 : vector<16x32xf32>
    %53 = vector.extract_strided_slice %10 {offsets = [2, 0], sizes = [1, 32], strides = [1, 1]} : vector<6x32xf32> to vector<1x32xf32>
    %54 = vector.extract_strided_slice %10 {offsets = [3, 0], sizes = [1, 32], strides = [1, 1]} : vector<6x32xf32> to vector<1x32xf32>
    %cst_29 = arith.constant dense<0.000000e+00> : vector<16xf32>
    %55 = vector.multi_reduction <add>, %52, %cst_29 [1] : vector<16x32xf32> to vector<16xf32>
    %56 = vector.shape_cast %55 : vector<16xf32> to vector<16x1xf32>
    %cst_30 = arith.constant 3.200000e+01 : f32
    %57 = vector.broadcast %cst_30 : f32 to vector<16x1xf32>
    %58 = arith.divf %56, %57 : vector<16x1xf32>
    %59 = vector.broadcast %58 : vector<16x1xf32> to vector<16x32xf32>
    %60 = arith.subf %52, %59 : vector<16x32xf32>
    %61 = arith.mulf %60, %60 : vector<16x32xf32>
    %cst_31 = arith.constant dense<0.000000e+00> : vector<16xf32>
    %62 = vector.multi_reduction <add>, %61, %cst_31 [1] : vector<16x32xf32> to vector<16xf32>
    %63 = vector.shape_cast %62 : vector<16xf32> to vector<16x1xf32>
    %cst_32 = arith.constant 3.200000e+01 : f32
    %64 = vector.broadcast %cst_32 : f32 to vector<16x1xf32>
    %65 = arith.divf %63, %64 : vector<16x1xf32>
    %66 = vector.broadcast %58 : vector<16x1xf32> to vector<16x32xf32>
    %67 = arith.subf %52, %66 : vector<16x32xf32>
    %cst_33 = arith.constant 9.99999997E-7 : f32
    %68 = vector.broadcast %cst_33 : f32 to vector<16x1xf32>
    %69 = arith.addf %65, %68 : vector<16x1xf32>
    %70 = math.rsqrt %69 : vector<16x1xf32>
    %71 = vector.broadcast %70 : vector<16x1xf32> to vector<16x32xf32>
    %72 = arith.mulf %67, %71 : vector<16x32xf32>
    %73 = vector.broadcast %53 : vector<1x32xf32> to vector<16x32xf32>
    %74 = arith.mulf %72, %73 : vector<16x32xf32>
    %75 = vector.broadcast %54 : vector<1x32xf32> to vector<16x32xf32>
    %76 = arith.addf %74, %75 : vector<16x32xf32>
    %c0_34 = arith.constant 0 : index
    %c0_35 = arith.constant 0 : index
    %c0_36 = arith.constant 0 : index
    %77 = vector.load %arg6[%c0_34, %c0_35, %c0_36] : memref<2x32x64xf32, #tpu.memory_space<vmem>>, vector<1x32x64xf32>
    %78 = vector.shape_cast %77 : vector<1x32x64xf32> to vector<32x64xf32>
    %cst_37 = arith.constant dense<0.000000e+00> : vector<16x64xf32>
    %79 = tpu.matmul %76, %78, %cst_37 {dimension_numbers = #tpu.dot_dimension_numbers<[1], [0], [0], [1], [0, 0, 1, 1], [], []>} : vector<16x32xf32>, vector<32x64xf32>, vector<16x64xf32> -> vector<16x64xf32>
    %c0_38 = arith.constant 0 : index
    %c0_39 = arith.constant 0 : index
    %c0_40 = arith.constant 0 : index
    %80 = vector.load %arg7[%c0_38, %c0_39, %c0_40] : memref<2x1x64xf32, #tpu.memory_space<vmem>>, vector<1x1x64xf32>
    %81 = vector.shape_cast %80 : vector<1x1x64xf32> to vector<1x64xf32>
    %82 = vector.broadcast %81 : vector<1x64xf32> to vector<16x64xf32>
    %83 = arith.addf %79, %82 : vector<16x64xf32>
    %84 = arith.mulf %83, %83 : vector<16x64xf32>
    %85 = arith.mulf %83, %84 : vector<16x64xf32>
    %cst_41 = arith.constant 4.471500e-02 : f32
    %86 = vector.broadcast %cst_41 : f32 to vector<16x64xf32>
    %87 = arith.mulf %86, %85 : vector<16x64xf32>
    %88 = arith.addf %83, %87 : vector<16x64xf32>
    %cst_42 = arith.constant 0.797884583 : f32
    %89 = vector.broadcast %cst_42 : f32 to vector<16x64xf32>
    %90 = arith.mulf %89, %88 : vector<16x64xf32>
    %91 = math.tanh %90 : vector<16x64xf32>
    %cst_43 = arith.constant 1.000000e+00 : f32
    %92 = vector.broadcast %cst_43 : f32 to vector<16x64xf32>
    %93 = arith.addf %92, %91 : vector<16x64xf32>
    %cst_44 = arith.constant 5.000000e-01 : f32
    %94 = vector.broadcast %cst_44 : f32 to vector<16x64xf32>
    %95 = arith.mulf %94, %93 : vector<16x64xf32>
    %96 = arith.mulf %83, %95 : vector<16x64xf32>
    %c0_45 = arith.constant 0 : index
    %c0_46 = arith.constant 0 : index
    %c0_47 = arith.constant 0 : index
    %97 = vector.load %arg8[%c0_45, %c0_46, %c0_47] : memref<2x64x32xf32, #tpu.memory_space<vmem>>, vector<1x64x32xf32>
    %98 = vector.shape_cast %97 : vector<1x64x32xf32> to vector<64x32xf32>
    %cst_48 = arith.constant dense<0.000000e+00> : vector<16x32xf32>
    %99 = tpu.matmul %96, %98, %cst_48 {dimension_numbers = #tpu.dot_dimension_numbers<[1], [0], [0], [1], [0, 0, 1, 1], [], []>} : vector<16x64xf32>, vector<64x32xf32>, vector<16x32xf32> -> vector<16x32xf32>
    %100 = vector.extract_strided_slice %10 {offsets = [1, 0], sizes = [1, 32], strides = [1, 1]} : vector<6x32xf32> to vector<1x32xf32>
    %101 = vector.broadcast %100 : vector<1x32xf32> to vector<16x32xf32>
    %102 = arith.addf %99, %101 : vector<16x32xf32>
    %103 = arith.addf %76, %102 : vector<16x32xf32>
    %104 = vector.extract_strided_slice %10 {offsets = [4, 0], sizes = [1, 32], strides = [1, 1]} : vector<6x32xf32> to vector<1x32xf32>
    %105 = vector.extract_strided_slice %10 {offsets = [5, 0], sizes = [1, 32], strides = [1, 1]} : vector<6x32xf32> to vector<1x32xf32>
    %cst_49 = arith.constant dense<0.000000e+00> : vector<16xf32>
    %106 = vector.multi_reduction <add>, %103, %cst_49 [1] : vector<16x32xf32> to vector<16xf32>
    %107 = vector.shape_cast %106 : vector<16xf32> to vector<16x1xf32>
    %cst_50 = arith.constant 3.200000e+01 : f32
    %108 = vector.broadcast %cst_50 : f32 to vector<16x1xf32>
    %109 = arith.divf %107, %108 : vector<16x1xf32>
    %110 = vector.broadcast %109 : vector<16x1xf32> to vector<16x32xf32>
    %111 = arith.subf %103, %110 : vector<16x32xf32>
    %112 = arith.mulf %111, %111 : vector<16x32xf32>
    %cst_51 = arith.constant dense<0.000000e+00> : vector<16xf32>
    %113 = vector.multi_reduction <add>, %112, %cst_51 [1] : vector<16x32xf32> to vector<16xf32>
    %114 = vector.shape_cast %113 : vector<16xf32> to vector<16x1xf32>
    %cst_52 = arith.constant 3.200000e+01 : f32
    %115 = vector.broadcast %cst_52 : f32 to vector<16x1xf32>
    %116 = arith.divf %114, %115 : vector<16x1xf32>
    %117 = vector.broadcast %109 : vector<16x1xf32> to vector<16x32xf32>
    %118 = arith.subf %103, %117 : vector<16x32xf32>
    %cst_53 = arith.constant 9.99999997E-7 : f32
    %119 = vector.broadcast %cst_53 : f32 to vector<16x1xf32>
    %120 = arith.addf %116, %119 : vector<16x1xf32>
    %121 = math.rsqrt %120 : vector<16x1xf32>
    %122 = vector.broadcast %121 : vector<16x1xf32> to vector<16x32xf32>
    %123 = arith.mulf %118, %122 : vector<16x32xf32>
    %124 = vector.broadcast %104 : vector<1x32xf32> to vector<16x32xf32>
    %125 = arith.mulf %123, %124 : vector<16x32xf32>
    %126 = vector.broadcast %105 : vector<1x32xf32> to vector<16x32xf32>
    %127 = arith.addf %125, %126 : vector<16x32xf32>
    %c1 = arith.constant 1 : index
    %c0_54 = arith.constant 0 : index
    %c0_55 = arith.constant 0 : index
    %128 = vector.load %arg3[%c1, %c0_54, %c0_55] : memref<2x32x96xf32, #tpu.memory_space<vmem>>, vector<1x32x96xf32>
    %129 = vector.shape_cast %128 : vector<1x32x96xf32> to vector<32x96xf32>
    %cst_56 = arith.constant dense<0.000000e+00> : vector<16x96xf32>
    %130 = tpu.matmul %127, %129, %cst_56 {dimension_numbers = #tpu.dot_dimension_numbers<[1], [0], [0], [1], [0, 0, 1, 1], [], []>} : vector<16x32xf32>, vector<32x96xf32>, vector<16x96xf32> -> vector<16x96xf32>
    %c1_57 = arith.constant 1 : index
    %c0_58 = arith.constant 0 : index
    %c0_59 = arith.constant 0 : index
    %131 = vector.load %arg4[%c1_57, %c0_58, %c0_59] : memref<2x1x96xf32, #tpu.memory_space<vmem>>, vector<1x1x96xf32>
    %132 = vector.shape_cast %131 : vector<1x1x96xf32> to vector<1x96xf32>
    %133 = vector.broadcast %132 : vector<1x96xf32> to vector<16x96xf32>
    %134 = arith.addf %130, %133 : vector<16x96xf32>
    %c1_60 = arith.constant 1 : index
    %c0_61 = arith.constant 0 : index
    %c0_62 = arith.constant 0 : index
    %135 = vector.load %arg9[%c1_60, %c0_61, %c0_62] : memref<2x6x32xf32, #tpu.memory_space<vmem>>, vector<1x6x32xf32>
    %136 = vector.shape_cast %135 : vector<1x6x32xf32> to vector<6x32xf32>
    %137 = vector.extract_strided_slice %134 {offsets = [0, 0], sizes = [16, 16], strides = [1, 1]} : vector<16x96xf32> to vector<16x16xf32>
    %138 = vector.extract_strided_slice %134 {offsets = [0, 32], sizes = [16, 16], strides = [1, 1]} : vector<16x96xf32> to vector<16x16xf32>
    %139 = vector.extract_strided_slice %134 {offsets = [0, 64], sizes = [16, 16], strides = [1, 1]} : vector<16x96xf32> to vector<16x16xf32>
    "tpu.trace_start"() <{level = 10 : i32, message = "qd,kd->qk"}> : () -> ()
    %cst_63 = arith.constant dense<0.000000e+00> : vector<16x16xf32>
    %140 = tpu.matmul %137, %138, %cst_63 {dimension_numbers = #tpu.dot_dimension_numbers<[1], [1], [0], [0], [0, 0, 1, 0], [], []>} : vector<16x16xf32>, vector<16x16xf32>, vector<16x16xf32> -> vector<16x16xf32>
    "tpu.trace_stop"() : () -> ()
    %141 = arith.addf %140, %1 : vector<16x16xf32>
    %cst_64 = arith.constant dense<0xFF800000> : vector<16xf32>
    %142 = vector.multi_reduction <maximumf>, %141, %cst_64 [1] : vector<16x16xf32> to vector<16xf32>
    %143 = vector.shape_cast %142 : vector<16xf32> to vector<16x1xf32>
    %144 = vector.broadcast %143 : vector<16x1xf32> to vector<16x16xf32>
    %145 = arith.subf %141, %144 : vector<16x16xf32>
    %146 = math.exp %145 : vector<16x16xf32>
    %cst_65 = arith.constant dense<0.000000e+00> : vector<16xf32>
    %147 = vector.multi_reduction <add>, %146, %cst_65 [1] : vector<16x16xf32> to vector<16xf32>
    %148 = vector.shape_cast %147 : vector<16xf32> to vector<16x1xf32>
    %149 = tpu.reciprocal %148 {approx = true} : vector<16x1xf32> -> vector<16x1xf32>
    %150 = vector.broadcast %149 : vector<16x1xf32> to vector<16x16xf32>
    %151 = arith.mulf %146, %150 : vector<16x16xf32>
    %cst_66 = arith.constant dense<0.000000e+00> : vector<16x16xf32>
    %152 = tpu.matmul %151, %139, %cst_66 {dimension_numbers = #tpu.dot_dimension_numbers<[1], [0], [0], [1], [0, 0, 1, 1], [], []>} : vector<16x16xf32>, vector<16x16xf32>, vector<16x16xf32> -> vector<16x16xf32>
    %c0_67 = arith.constant 0 : index
    %c0_68 = arith.constant 0 : index
    %153 = vector.load %arg14[%c0_67, %c0_68] : memref<16x32xf32, #tpu.memory_space<vmem>>, vector<16x16xf32>
    tpu.vector_store %arg14[%c0_67, %c0_68], %152 {strides = array<i32>} : memref<16x32xf32, #tpu.memory_space<vmem>>, vector<16x16xf32>,
    %154 = vector.extract_strided_slice %134 {offsets = [0, 16], sizes = [16, 16], strides = [1, 1]} : vector<16x96xf32> to vector<16x16xf32>
    %155 = vector.extract_strided_slice %134 {offsets = [0, 48], sizes = [16, 16], strides = [1, 1]} : vector<16x96xf32> to vector<16x16xf32>
    %156 = vector.extract_strided_slice %134 {offsets = [0, 80], sizes = [16, 16], strides = [1, 1]} : vector<16x96xf32> to vector<16x16xf32>
    "tpu.trace_start"() <{level = 10 : i32, message = "qd,kd->qk"}> : () -> ()
    %cst_69 = arith.constant dense<0.000000e+00> : vector<16x16xf32>
    %157 = tpu.matmul %154, %155, %cst_69 {dimension_numbers = #tpu.dot_dimension_numbers<[1], [1], [0], [0], [0, 0, 1, 0], [], []>} : vector<16x16xf32>, vector<16x16xf32>, vector<16x16xf32> -> vector<16x16xf32>
    "tpu.trace_stop"() : () -> ()
    %158 = arith.addf %157, %1 : vector<16x16xf32>
    %cst_70 = arith.constant dense<0xFF800000> : vector<16xf32>
    %159 = vector.multi_reduction <maximumf>, %158, %cst_70 [1] : vector<16x16xf32> to vector<16xf32>
    %160 = vector.shape_cast %159 : vector<16xf32> to vector<16x1xf32>
    %161 = vector.broadcast %160 : vector<16x1xf32> to vector<16x16xf32>
    %162 = arith.subf %158, %161 : vector<16x16xf32>
    %163 = math.exp %162 : vector<16x16xf32>
    %cst_71 = arith.constant dense<0.000000e+00> : vector<16xf32>
    %164 = vector.multi_reduction <add>, %163, %cst_71 [1] : vector<16x16xf32> to vector<16xf32>
    %165 = vector.shape_cast %164 : vector<16xf32> to vector<16x1xf32>
    %166 = tpu.reciprocal %165 {approx = true} : vector<16x1xf32> -> vector<16x1xf32>
    %167 = vector.broadcast %166 : vector<16x1xf32> to vector<16x16xf32>
    %168 = arith.mulf %163, %167 : vector<16x16xf32>
    %cst_72 = arith.constant dense<0.000000e+00> : vector<16x16xf32>
    %169 = tpu.matmul %168, %156, %cst_72 {dimension_numbers = #tpu.dot_dimension_numbers<[1], [0], [0], [1], [0, 0, 1, 1], [], []>} : vector<16x16xf32>, vector<16x16xf32>, vector<16x16xf32> -> vector<16x16xf32>
    %c0_73 = arith.constant 0 : index
    %c16_74 = arith.constant 16 : index
    %170 = vector.load %arg14[%c0_73, %c16_74] : memref<16x32xf32, #tpu.memory_space<vmem>>, vector<16x16xf32>
    tpu.vector_store %arg14[%c0_73, %c16_74], %169 {strides = array<i32>} : memref<16x32xf32, #tpu.memory_space<vmem>>, vector<16x16xf32>,
    %c0_75 = arith.constant 0 : index
    %c0_76 = arith.constant 0 : index
    %171 = vector.load %arg14[%c0_75, %c0_76] : memref<16x32xf32, #tpu.memory_space<vmem>>, vector<16x32xf32>
    %c1_77 = arith.constant 1 : index
    %c0_78 = arith.constant 0 : index
    %c0_79 = arith.constant 0 : index
    %172 = vector.load %arg5[%c1_77, %c0_78, %c0_79] : memref<2x32x32xf32, #tpu.memory_space<vmem>>, vector<1x32x32xf32>
    %173 = vector.shape_cast %172 : vector<1x32x32xf32> to vector<32x32xf32>
    %cst_80 = arith.constant dense<0.000000e+00> : vector<16x32xf32>
    %174 = tpu.matmul %171, %173, %cst_80 {dimension_numbers = #tpu.dot_dimension_numbers<[1], [0], [0], [1], [0, 0, 1, 1], [], []>} : vector<16x32xf32>, vector<32x32xf32>, vector<16x32xf32> -> vector<16x32xf32>
    %175 = vector.extract_strided_slice %136 {offsets = [0, 0], sizes = [1, 32], strides = [1, 1]} : vector<6x32xf32> to vector<1x32xf32>
    %176 = vector.broadcast %175 : vector<1x32xf32> to vector<16x32xf32>
    %177 = arith.addf %174, %176 : vector<16x32xf32>
    %178 = arith.addf %127, %177 : vector<16x32xf32>
    %179 = vector.extract_strided_slice %136 {offsets = [2, 0], sizes = [1, 32], strides = [1, 1]} : vector<6x32xf32> to vector<1x32xf32>
    %180 = vector.extract_strided_slice %136 {offsets = [3, 0], sizes = [1, 32], strides = [1, 1]} : vector<6x32xf32> to vector<1x32xf32>
    %cst_81 = arith.constant dense<0.000000e+00> : vector<16xf32>
    %181 = vector.multi_reduction <add>, %178, %cst_81 [1] : vector<16x32xf32> to vector<16xf32>
    %182 = vector.shape_cast %181 : vector<16xf32> to vector<16x1xf32>
    %cst_82 = arith.constant 3.200000e+01 : f32
    %183 = vector.broadcast %cst_82 : f32 to vector<16x1xf32>
    %184 = arith.divf %182, %183 : vector<16x1xf32>
    %185 = vector.broadcast %184 : vector<16x1xf32> to vector<16x32xf32>
    %186 = arith.subf %178, %185 : vector<16x32xf32>
    %187 = arith.mulf %186, %186 : vector<16x32xf32>
    %cst_83 = arith.constant dense<0.000000e+00> : vector<16xf32>
    %188 = vector.multi_reduction <add>, %187, %cst_83 [1] : vector<16x32xf32> to vector<16xf32>
    %189 = vector.shape_cast %188 : vector<16xf32> to vector<16x1xf32>
    %cst_84 = arith.constant 3.200000e+01 : f32
    %190 = vector.broadcast %cst_84 : f32 to vector<16x1xf32>
    %191 = arith.divf %189, %190 : vector<16x1xf32>
    %192 = vector.broadcast %184 : vector<16x1xf32> to vector<16x32xf32>
    %193 = arith.subf %178, %192 : vector<16x32xf32>
    %cst_85 = arith.constant 9.99999997E-7 : f32
    %194 = vector.broadcast %cst_85 : f32 to vector<16x1xf32>
    %195 = arith.addf %191, %194 : vector<16x1xf32>
    %196 = math.rsqrt %195 : vector<16x1xf32>
    %197 = vector.broadcast %196 : vector<16x1xf32> to vector<16x32xf32>
    %198 = arith.mulf %193, %197 : vector<16x32xf32>
    %199 = vector.broadcast %179 : vector<1x32xf32> to vector<16x32xf32>
    %200 = arith.mulf %198, %199 : vector<16x32xf32>
    %201 = vector.broadcast %180 : vector<1x32xf32> to vector<16x32xf32>
    %202 = arith.addf %200, %201 : vector<16x32xf32>
    %c1_86 = arith.constant 1 : index
    %c0_87 = arith.constant 0 : index
    %c0_88 = arith.constant 0 : index
    %203 = vector.load %arg6[%c1_86, %c0_87, %c0_88] : memref<2x32x64xf32, #tpu.memory_space<vmem>>, vector<1x32x64xf32>
    %204 = vector.shape_cast %203 : vector<1x32x64xf32> to vector<32x64xf32>
    %cst_89 = arith.constant dense<0.000000e+00> : vector<16x64xf32>
    %205 = tpu.matmul %202, %204, %cst_89 {dimension_numbers = #tpu.dot_dimension_numbers<[1], [0], [0], [1], [0, 0, 1, 1], [], []>} : vector<16x32xf32>, vector<32x64xf32>, vector<16x64xf32> -> vector<16x64xf32>
    %c1_90 = arith.constant 1 : index
    %c0_91 = arith.constant 0 : index
    %c0_92 = arith.constant 0 : index
    %206 = vector.load %arg7[%c1_90, %c0_91, %c0_92] : memref<2x1x64xf32, #tpu.memory_space<vmem>>, vector<1x1x64xf32>
    %207 = vector.shape_cast %206 : vector<1x1x64xf32> to vector<1x64xf32>
    %208 = vector.broadcast %207 : vector<1x64xf32> to vector<16x64xf32>
    %209 = arith.addf %205, %208 : vector<16x64xf32>
    %210 = arith.mulf %209, %209 : vector<16x64xf32>
    %211 = arith.mulf %209, %210 : vector<16x64xf32>
    %cst_93 = arith.constant 4.471500e-02 : f32
    %212 = vector.broadcast %cst_93 : f32 to vector<16x64xf32>
    %213 = arith.mulf %212, %211 : vector<16x64xf32>
    %214 = arith.addf %209, %213 : vector<16x64xf32>
    %cst_94 = arith.constant 0.797884583 : f32
    %215 = vector.broadcast %cst_94 : f32 to vector<16x64xf32>
    %216 = arith.mulf %215, %214 : vector<16x64xf32>
    %217 = math.tanh %216 : vector<16x64xf32>
    %cst_95 = arith.constant 1.000000e+00 : f32
    %218 = vector.broadcast %cst_95 : f32 to vector<16x64xf32>
    %219 = arith.addf %218, %217 : vector<16x64xf32>
    %cst_96 = arith.constant 5.000000e-01 : f32
    %220 = vector.broadcast %cst_96 : f32 to vector<16x64xf32>
    %221 = arith.mulf %220, %219 : vector<16x64xf32>
    %222 = arith.mulf %209, %221 : vector<16x64xf32>
    %c1_97 = arith.constant 1 : index
    %c0_98 = arith.constant 0 : index
    %c0_99 = arith.constant 0 : index
    %223 = vector.load %arg8[%c1_97, %c0_98, %c0_99] : memref<2x64x32xf32, #tpu.memory_space<vmem>>, vector<1x64x32xf32>
    %224 = vector.shape_cast %223 : vector<1x64x32xf32> to vector<64x32xf32>
    %cst_100 = arith.constant dense<0.000000e+00> : vector<16x32xf32>
    %225 = tpu.matmul %222, %224, %cst_100 {dimension_numbers = #tpu.dot_dimension_numbers<[1], [0], [0], [1], [0, 0, 1, 1], [], []>} : vector<16x64xf32>, vector<64x32xf32>, vector<16x32xf32> -> vector<16x32xf32>
    %226 = vector.extract_strided_slice %136 {offsets = [1, 0], sizes = [1, 32], strides = [1, 1]} : vector<6x32xf32> to vector<1x32xf32>
    %227 = vector.broadcast %226 : vector<1x32xf32> to vector<16x32xf32>
    %228 = arith.addf %225, %227 : vector<16x32xf32>
    %229 = arith.addf %202, %228 : vector<16x32xf32>
    %230 = vector.extract_strided_slice %136 {offsets = [4, 0], sizes = [1, 32], strides = [1, 1]} : vector<6x32xf32> to vector<1x32xf32>
    %231 = vector.extract_strided_slice %136 {offsets = [5, 0], sizes = [1, 32], strides = [1, 1]} : vector<6x32xf32> to vector<1x32xf32>
    %cst_101 = arith.constant dense<0.000000e+00> : vector<16xf32>
    %232 = vector.multi_reduction <add>, %229, %cst_101 [1] : vector<16x32xf32> to vector<16xf32>
    %233 = vector.shape_cast %232 : vector<16xf32> to vector<16x1xf32>
    %cst_102 = arith.constant 3.200000e+01 : f32
    %234 = vector.broadcast %cst_102 : f32 to vector<16x1xf32>
    %235 = arith.divf %233, %234 : vector<16x1xf32>
    %236 = vector.broadcast %235 : vector<16x1xf32> to vector<16x32xf32>
    %237 = arith.subf %229, %236 : vector<16x32xf32>
    %238 = arith.mulf %237, %237 : vector<16x32xf32>
    %cst_103 = arith.constant dense<0.000000e+00> : vector<16xf32>
    %239 = vector.multi_reduction <add>, %238, %cst_103 [1] : vector<16x32xf32> to vector<16xf32>
    %240 = vector.shape_cast %239 : vector<16xf32> to vector<16x1xf32>
    %cst_104 = arith.constant 3.200000e+01 : f32
    %241 = vector.broadcast %cst_104 : f32 to vector<16x1xf32>
    %242 = arith.divf %240, %241 : vector<16x1xf32>
    %243 = vector.broadcast %235 : vector<16x1xf32> to vector<16x32xf32>
    %244 = arith.subf %229, %243 : vector<16x32xf32>
    %cst_105 = arith.constant 9.99999997E-7 : f32
    %245 = vector.broadcast %cst_105 : f32 to vector<16x1xf32>
    %246 = arith.addf %242, %245 : vector<16x1xf32>
    %247 = math.rsqrt %246 : vector<16x1xf32>
    %248 = vector.broadcast %247 : vector<16x1xf32> to vector<16x32xf32>
    %249 = arith.mulf %244, %248 : vector<16x32xf32>
    %250 = vector.broadcast %230 : vector<1x32xf32> to vector<16x32xf32>
    %251 = arith.mulf %249, %250 : vector<16x32xf32>
    %252 = vector.broadcast %231 : vector<1x32xf32> to vector<16x32xf32>
    %253 = arith.addf %251, %252 : vector<16x32xf32>
    %c0_106 = arith.constant 0 : index
    %c0_107 = arith.constant 0 : index
    %254 = vector.load %arg10[%c0_106, %c0_107] : memref<1x32xf32, #tpu.memory_space<vmem>>, vector<1x32xf32>
    %255 = vector.broadcast %254 : vector<1x32xf32> to vector<16x32xf32>
    %256 = arith.mulf %253, %255 : vector<16x32xf32>
    %cst_108 = arith.constant dense<0.000000e+00> : vector<16xf32>
    %257 = vector.multi_reduction <add>, %256, %cst_108 [1] : vector<16x32xf32> to vector<16xf32>
    %258 = vector.shape_cast %257 : vector<16xf32> to vector<16x1xf32>
    %c0_109 = arith.constant 0 : index
    %c0_110 = arith.constant 0 : index
    %259 = vector.load %arg11[%c0_109, %c0_110] : memref<1x1xf32, #tpu.memory_space<vmem>>, vector<1x1xf32>
    %260 = vector.broadcast %259 : vector<1x1xf32> to vector<16x1xf32>
    %261 = arith.addf %258, %260 : vector<16x1xf32>
    %262 = arith.negf %261 : vector<16x1xf32>
    %263 = math.exp %262 : vector<16x1xf32>
    %cst_111 = arith.constant 1.000000e+00 : f32
    %264 = vector.broadcast %cst_111 : f32 to vector<16x1xf32>
    %265 = arith.addf %264, %263 : vector<16x1xf32>
    %266 = arith.divf %264, %265 : vector<16x1xf32>
    %c0_112 = arith.constant 0 : index
    %c0_113 = arith.constant 0 : index
    %267 = vector.load %arg12[%c0_112, %c0_113] : memref<16x1xf32, #tpu.memory_space<vmem>>, vector<16x1xf32>
    tpu.vector_store %arg12[%c0_112, %c0_113], %266 {strides = array<i32>} : memref<16x1xf32, #tpu.memory_space<vmem>>, vector<16x1xf32>,
    %c0_114 = arith.constant 0 : index
    %c0_115 = arith.constant 0 : index
    %268 = vector.load %arg2[%c0_114, %c0_115] : memref<16x1xf32, #tpu.memory_space<vmem>>, vector<16x1xf32>
    %cst_116 = arith.constant 0.000000e+00 : f32
    %269 = vector.broadcast %cst_116 : f32 to vector<16x1xf32>
    %270 = arith.maximumf %261, %269 : vector<16x1xf32>
    %271 = arith.mulf %261, %268 : vector<16x1xf32>
    %272 = arith.subf %270, %271 : vector<16x1xf32>
    %273 = math.absf %261 : vector<16x1xf32>
    %cst_117 = arith.constant 0.000000e+00 : f32
    %274 = vector.broadcast %cst_117 : f32 to vector<16x1xf32>
    %275 = arith.subf %274, %273 : vector<16x1xf32>
    %276 = math.exp %275 : vector<16x1xf32>
    %277 = math.log1p %276 : vector<16x1xf32>
    %278 = arith.addf %272, %277 : vector<16x1xf32>
    %cst_118 = arith.constant -1.000000e+02 : f32
    %279 = vector.broadcast %cst_118 : f32 to vector<16x1xf32>
    %280 = arith.cmpf one, %268, %279 : vector<16x1xf32>
    %281 = arith.extui %280 : vector<16x1xi1> to vector<16x1xi32>
    %282 = arith.sitofp %281 : vector<16x1xi32> to vector<16x1xf32>
    %283 = arith.mulf %278, %282 : vector<16x1xf32>
    %284 = vector.shape_cast %283 : vector<16x1xf32> to vector<1x16x1xf32>
    %cst_119 = arith.constant dense<0.000000e+00> : vector<1xf32>
    %285 = vector.multi_reduction <add>, %284, %cst_119 [1, 2] : vector<1x16x1xf32> to vector<1xf32>
    %286 = vector.shape_cast %285 : vector<1xf32> to vector<1x1x1xf32>
    %287 = vector.extract %286[0, 0, 0] : f32 from vector<1x1x1xf32>
    %288 = vector.shape_cast %282 : vector<16x1xf32> to vector<1x16x1xf32>
    %cst_120 = arith.constant dense<0.000000e+00> : vector<1xf32>
    %289 = vector.multi_reduction <add>, %288, %cst_120 [1, 2] : vector<1x16x1xf32> to vector<1xf32>
    %290 = vector.shape_cast %289 : vector<1xf32> to vector<1x1x1xf32>
    %291 = vector.extract %290[0, 0, 0] : f32 from vector<1x1x1xf32>
    %cst_121 = arith.constant 1.000000e+00 : f32
    %292 = arith.maximumf %291, %cst_121 : f32
    %293 = arith.divf %287, %292 : f32
    %294 = vector.broadcast %293 : f32 to vector<1x1xf32>
    %c0_122 = arith.constant 0 : index
    %c0_123 = arith.constant 0 : index
    %295 = vector.load %arg13[%c0_122, %c0_123] : memref<1x1xf32, #tpu.memory_space<vmem>>, vector<1x1xf32>
    tpu.vector_store %arg13[%c0_122, %c0_123], %294 {strides = array<i32>} : memref<1x1xf32, #tpu.memory_space<vmem>>, vector<1x1xf32>,
    return
  }
}

</mosaic_0001>

<llo_original>
// kernel: nbme_forward.1
$region0: #{nbme_forward.1}
  #allocation0 [shape = 'u32[]', space=smem, size = 0x4, offset = 0x4, fixed_abs, tag = 'smem constant byte address 0x4 - core index']
  #allocation1 [shape = 'u32[144,128]{1,0:T(1,128)}', space=vmem, size = 0x12000, scoped, tag = 'internal scratch']
  #allocation2 [shape = 'f32[16,32]{1,0:T(8,128)}', space=vmem, size = 0x2000, scoped, tag = 'scratch operand']
  #allocation3 [shape = 'f32[1,1]{1,0:T(1,128)S(1)}', space=vmem, size = 0x200, scoped, tag = 'scoped memory for nbme_forward.1']
  %s0 = inlined_call_operand.vmem [shape: f32[16,32], index: 0, kind: input, shape index: {}]
  %s1 = inlined_call_operand.vmem [shape: f32[16,16], index: 1, kind: input, shape index: {}]
  %s2 = inlined_call_operand.vmem [shape: f32[16,1], index: 2, kind: input, shape index: {}]
  %s3 = inlined_call_operand.vmem [shape: f32[2,32,96], index: 3, kind: input, shape index: {}]
  %s4 = inlined_call_operand.vmem [shape: f32[2,1,96], index: 4, kind: input, shape index: {}]
  %s5 = inlined_call_operand.vmem [shape: f32[2,32,32], index: 5, kind: input, shape index: {}]
  %s6 = inlined_call_operand.vmem [shape: f32[2,32,64], index: 6, kind: input, shape index: {}]
  %s7 = inlined_call_operand.vmem [shape: f32[2,1,64], index: 7, kind: input, shape index: {}]
  %s8 = inlined_call_operand.vmem [shape: f32[2,64,32], index: 8, kind: input, shape index: {}]
  %s9 = inlined_call_operand.vmem [shape: f32[2,6,32], index: 9, kind: input, shape index: {}]
  %s10 = inlined_call_operand.vmem [shape: f32[1,32], index: 10, kind: input, shape index: {}]
  %s11 = inlined_call_operand.<no memory space> [shape: f32[1,1], index: 11, kind: input, shape index: {}]
  %s12 = inlined_call_operand.vmem [shape: f32[16,1], index: 12, kind: output, shape index: {0}]
  %s13 = inlined_call_operand.hbm [shape: f32[1,1], index: 13, kind: output, shape index: {1}]
  %14 = xla_tuple %s12, %s13
  %s15 = sld [smem:[#allocation0]]
  $region66: #{nbme_forward.1} parent=0
    _
  %s17 = ssub.s32 1, %s15
  %s18 = scalar_select 0, %s17, %s15
  %v19 = vstv %s11
  %20 = vst [vmem:[#allocation3] sm:$0x1] %v19
  $region1: #{nbme_forward.1} parent=0
    #allocation4 [shape = 'u8[512]{0}', space=vmem, size = 0x400, scoped, tag = 'output window, operand 1, single buffered']
    #allocation5 [shape = 's32[1]{0}', space=sflag, size = 0x4, scoped, tag = 'scoped memory for nbme_forward.1']
    %21 = vsyncpa [#allocation5], 0
    // Predicated region
    $region2: #{nbme_forward.1} parent=1 // pred_check
      _
    $region3: #{nbme_forward.1} parent=1 // pred_check_branch
      %23 = sbr.rel (0) target = $region5
    $region4: #{nbme_forward.1} parent=1 // pred_region
      _
    $region5: #{nbme_forward.1} parent=1 // pred_fallthru
      _
    // Predicated region
    $region6: #{nbme_forward.1} parent=1 // pred_check
      _
    $region7: #{nbme_forward.1} parent=1 // pred_check_branch
      %25 = sbr.rel (0) target = $region9
    $region8: #{nbme_forward.1} parent=1 // pred_region
      _
    $region9: #{nbme_forward.1} parent=1 // pred_fallthru
      _
    // Predicated region
    $region10: #{nbme_forward.1} parent=1 // pred_check
      _
    $region11: #{nbme_forward.1} parent=1 // pred_check_branch
      %27 = sbr.rel (0) target = $region13
    $region12: #{nbme_forward.1} parent=1 // pred_region
      _
    $region13: #{nbme_forward.1} parent=1 // pred_fallthru
      _
    // Predicated region
    $region14: #{nbme_forward.1} parent=1 // pred_check
      _
    $region15: #{nbme_forward.1} parent=1 // pred_check_branch
      %29 = sbr.rel (0) target = $region17
    $region16: #{nbme_forward.1} parent=1 // pred_region
      _
    $region17: #{nbme_forward.1} parent=1 // pred_fallthru
      _
    // Predicated region
    $region18: #{nbme_forward.1} parent=1 // pred_check
      _
    $region19: #{nbme_forward.1} parent=1 // pred_check_branch
      %31 = sbr.rel (0) target = $region21
    $region20: #{nbme_forward.1} parent=1 // pred_region
      _
    $region21: #{nbme_forward.1} parent=1 // pred_fallthru
      _
    // Predicated region
    $region22: #{nbme_forward.1} parent=1 // pred_check
      _
    $region23: #{nbme_forward.1} parent=1 // pred_check_branch
      %33 = sbr.rel (0) target = $region25
    $region24: #{nbme_forward.1} parent=1 // pred_region
      _
    $region25: #{nbme_forward.1} parent=1 // pred_fallthru
      _
    // Predicated region
    $region26: #{nbme_forward.1} parent=1 // pred_check
      _
    $region27: #{nbme_forward.1} parent=1 // pred_check_branch
      %35 = sbr.rel (0) target = $region29
    $region28: #{nbme_forward.1} parent=1 // pred_region
      _
    $region29: #{nbme_forward.1} parent=1 // pred_fallthru
      _
    // Predicated region
    $region30: #{nbme_forward.1} parent=1 // pred_check
      _
    $region31: #{nbme_forward.1} parent=1 // pred_check_branch
      %37 = sbr.rel (0) target = $region33
    $region32: #{nbme_forward.1} parent=1 // pred_region
      _
    $region33: #{nbme_forward.1} parent=1 // pred_fallthru
      _
    // Predicated region
    $region34: #{nbme_forward.1} parent=1 // pred_check
      _
    $region35: #{nbme_forward.1} parent=1 // pred_check_branch
      %39 = sbr.rel (0) target = $region37
    $region36: #{nbme_forward.1} parent=1 // pred_region
      _
    $region37: #{nbme_forward.1} parent=1 // pred_fallthru
      _
    // Predicated region
    $region38: #{nbme_forward.1} parent=1 // pred_check
      _
    $region39: #{nbme_forward.1} parent=1 // pred_check_branch
      %41 = sbr.rel (0) target = $region41
    $region40: #{nbme_forward.1} parent=1 // pred_region
      _
    $region41: #{nbme_forward.1} parent=1 // pred_fallthru
      _
    // Predicated region
    $region42: #{nbme_forward.1} parent=1 // pred_check
      _
    $region43: #{nbme_forward.1} parent=1 // pred_check_branch
      %43 = sbr.rel (0) target = $region45
    $region44: #{nbme_forward.1} parent=1 // pred_region
      _
    $region45: #{nbme_forward.1} parent=1 // pred_fallthru
      _
    // Predicated region
    $region46: #{nbme_forward.1} parent=1 // pred_check
      _
    $region47: #{nbme_forward.1} parent=1 // pred_check_branch
      %45 = sbr.rel (0) target = $region49
    $region48: #{nbme_forward.1} parent=1 // pred_region
      _
    $region49: #{nbme_forward.1} parent=1 // pred_fallthru
      _
    %v46 = vld [vmem:[%s0] sm:$0xff]
    %v47 = vld [vmem:[%s0 + $0x8] sm:$0xff]
    %v48 = vld [vmem:[%s1] sm:$0xff]
    %v49 = vld [vmem:[%s1 + $0x8] sm:$0xff]
    %v50 = vld [vmem:[%s3] sm:$0xff]
    %v51 = vld [vmem:[%s3 + $0x8] sm:$0xff]
    %v52 = vld [vmem:[%s3 + $0x10] sm:$0xff]
    %v53 = vld [vmem:[%s3 + $0x18] sm:$0xff]
    %v54 = vld [vmem:[%s4] sm:$0x1]
    %v56 = vlaneseq
    %v57 = vshrl.u32 %v56, 7
    %v58 = vsub.s32 0, %v57
    %v59 = vrot.slane %v54, %v58
    %vm61 = vcmask 261120
    %v63 = vsel %vm61, %v46, 0
    %v66 = vsel %vm61, %v47, 0
    %68 = vmatprep.subr.mxu0 0.0
    %69 = vmatpush1.msra.mxu0 %v50
    %70 = vmatprep.subr.mxu0 0.0
    %71 = vmatpush1.msra.mxu0 %v51
    %72 = vmatprep.subr.mxu0 0.0
    %73 = vmatpush1.msra.mxu0 %v52
    %74 = vmatprep.subr.mxu0 0.0
    %75 = vmatpush1.msra.mxu0 %v53
    %76 = vmatprep.subr.mxu0 0.0
    %77 = vmatpush1.msra.mxu0 0.0
    %78 = vmatprep.subr.mxu0 0.0
    %79 = vmatpush1.msra.mxu0 0.0
    %80 = vmatprep.subr.mxu0 0.0
    %81 = vmatpush1.msra.mxu0 0.0
    %82 = vmatprep.subr.mxu0 0.0
    %83 = vmatpush1.msra.mxu0 0.0
    %84 = vmatprep.subr.mxu0 0.0
    %85 = vmatpush1.msra.mxu0 0.0
    %86 = vmatprep.subr.mxu0 0.0
    %87 = vmatpush1.msra.mxu0 0.0
    %88 = vmatprep.subr.mxu0 0.0
    %89 = vmatpush1.msra.mxu0 0.0
    %90 = vmatprep.subr.mxu0 0.0
    %91 = vmatpush1.msra.mxu0 0.0
    %92 = vmatprep.subr.mxu0 0.0
    %93 = vmatpush1.msra.mxu0 0.0
    %94 = vmatprep.subr.mxu0 0.0
    %95 = vmatpush1.msra.mxu0 0.0
    %96 = vmatprep.subr.mxu0 0.0
    %97 = vmatpush1.msra.mxu0 0.0
    %98 = vmatprep.subr.mxu0 0.0
    %99 = vmatpush1.msra.mxu0 0.0
    %100 = vmatprep.subr.mxu0 0.0
    %101 = vmatpush1.msra.mxu0 0.0
    %102 = vmatprep.subr.mxu0 0.0
    %103 = vmatpush1.msra.mxu0 0.0
    %104 = vmatprep.subr.mxu0 0.0
    %105 = vmatpush1.msra.mxu0 0.0
    %106 = vmatprep.subr.mxu0 0.0
    %107 = vmatpush1.msra.mxu0 0.0
    %108 = vmatprep.subr.mxu0 0.0
    %109 = vmatpush1.msra.mxu0 0.0
    %110 = vmatprep.subr.mxu0 0.0
    %111 = vmatpush1.msra.mxu0 0.0
    %112 = vmatprep.subr.mxu0 0.0
    %113 = vmatpush1.msra.mxu0 0.0
    %114 = vmatprep.subr.mxu0 0.0
    %115 = vmatpush1.msra.mxu0 0.0
    %116 = vmatprep.subr.mxu0 0.0
    %117 = vmatpush1.msra.mxu0 0.0
    %118 = vmatprep.subr.mxu0 0.0
    %119 = vmatpush1.msra.mxu0 0.0
    %120 = vmatprep.subr.mxu0 0.0
    %121 = vmatpush1.msra.mxu0 0.0
    %122 = vmatprep.subr.mxu0 0.0
    %123 = vmatpush1.msra.mxu0 0.0
    %124 = vmatprep.subr.mxu0 0.0
    %125 = vmatpush1.msra.mxu0 0.0
    %126 = vmatprep.subr.mxu0 0.0
    %127 = vmatpush1.msra.mxu0 0.0
    %128 = vmatprep.subr.mxu0 0.0
    %129 = vmatpush1.msra.mxu0 0.0
    %130 = vmatprep.subr.mxu0 0.0
    %131 = vmatpush1.msra.mxu0 0.0
    %132 = vmatprep.mubr.f32.mxu0 0.0
    %133 = vmatmul.mubr.f32.gmra.mrb[0].mxu0 %v63
    %v134 = vpop.f32.mrb[0].mxu0
    %v135 = vadd.f32 %v59, %v134
    %v136 = vpop.f32.mrb[0].mxu0
    %137 = vmatprep.mubr.f32.mxu0 0.0
    %138 = vmatmul.mubr.f32.gmra.mrb[0].mxu0 %v66
    %v139 = vpop.f32.mrb[0].mxu0
    %v140 = vadd.f32 %v59, %v139
    %v141 = vpop.f32.mrb[0].mxu0
    %142 = vdwg.mxu0
    %v143 = vld [vmem:[%s9] sm:$0x3f]
    %146 = vrot.lane.b32.xlu0 %v135, 96
    %v147 = vpop.permute.xlu0 %146
    %148 = vrot.lane.b32.xlu0 %v140, 96
    %v149 = vpop.permute.xlu0 %148
    %vm150 = vcmask 130048
    %v151 = vsel %vm150, %v135, 0
    %v153 = vsel %vm150, %v140, 0
    %v155 = vsel %vm150, %v147, 0
    %v157 = vsel %vm150, %v149, 0
    %159 = vmatprep.subr.mxu0 0.0
    %160 = vmatpush1.xpose.msra.mxu0 %v155
    %161 = vmatprep.subr.mxu0 0.0
    %162 = vmatpush1.xpose.msra.mxu0 %v157
    %163 = vmatprep.subr.mxu0 0.0
    %164 = vmatpush1.xpose.msra.mxu0 0.0
    %165 = vmatprep.subr.mxu0 0.0
    %166 = vmatpush1.xpose.msra.mxu0 0.0
    %167 = vmatprep.subr.mxu0 0.0
    %168 = vmatpush1.xpose.msra.mxu0 0.0
    %169 = vmatprep.subr.mxu0 0.0
    %170 = vmatpush1.xpose.msra.mxu0 0.0
    %171 = vmatprep.subr.mxu0 0.0
    %172 = vmatpush1.xpose.msra.mxu0 0.0
    %173 = vmatprep.subr.mxu0 0.0
    %174 = vmatpush1.xpose.msra.mxu0 0.0
    %175 = vmatprep.subr.mxu0 0.0
    %176 = vmatpush1.xpose.msra.mxu0 0.0
    %177 = vmatprep.subr.mxu0 0.0
    %178 = vmatpush1.xpose.msra.mxu0 0.0
    %179 = vmatprep.subr.mxu0 0.0
    %180 = vmatpush1.xpose.msra.mxu0 0.0
    %181 = vmatprep.subr.mxu0 0.0
    %182 = vmatpush1.xpose.msra.mxu0 0.0
    %183 = vmatprep.subr.mxu0 0.0
    %184 = vmatpush1.xpose.msra.mxu0 0.0
    %185 = vmatprep.subr.mxu0 0.0
    %186 = vmatpush1.xpose.msra.mxu0 0.0
    %187 = vmatprep.subr.mxu0 0.0
    %188 = vmatpush1.xpose.msra.mxu0 0.0
    %189 = vmatprep.subr.mxu0 0.0
    %190 = vmatpush1.xpose.msra.mxu0 0.0
    %191 = vmatprep.subr.mxu0 0.0
    %192 = vmatpush1.xpose.msra.mxu0 0.0
    %193 = vmatprep.subr.mxu0 0.0
    %194 = vmatpush1.xpose.msra.mxu0 0.0
    %195 = vmatprep.subr.mxu0 0.0
    %196 = vmatpush1.xpose.msra.mxu0 0.0
    %197 = vmatprep.subr.mxu0 0.0
    %198 = vmatpush1.xpose.msra.mxu0 0.0
    %199 = vmatprep.subr.mxu0 0.0
    %200 = vmatpush1.xpose.msra.mxu0 0.0
    %201 = vmatprep.subr.mxu0 0.0
    %202 = vmatpush1.xpose.msra.mxu0 0.0
    %203 = vmatprep.subr.mxu0 0.0
    %204 = vmatpush1.xpose.msra.mxu0 0.0
    %205 = vmatprep.subr.mxu0 0.0
    %206 = vmatpush1.xpose.msra.mxu0 0.0
    %207 = vmatprep.subr.mxu0 0.0
    %208 = vmatpush1.xpose.msra.mxu0 0.0
    %209 = vmatprep.subr.mxu0 0.0
    %210 = vmatpush1.xpose.msra.mxu0 0.0
    %211 = vmatprep.subr.mxu0 0.0
    %212 = vmatpush1.xpose.msra.mxu0 0.0
    %213 = vmatprep.subr.mxu0 0.0
    %214 = vmatpush1.xpose.msra.mxu0 0.0
    %215 = vmatprep.subr.mxu0 0.0
    %216 = vmatpush1.xpose.msra.mxu0 0.0
    %217 = vmatprep.subr.mxu0 0.0
    %218 = vmatpush1.xpose.msra.mxu0 0.0
    %219 = vmatprep.subr.mxu0 0.0
    %220 = vmatpush1.xpose.msra.mxu0 0.0
    %221 = vmatprep.subr.mxu0 0.0
    %222 = vmatpush1.xpose.msra.mxu0 0.0
    %223 = vmatprep.mubr.f32.mxu0 0.0
    %224 = vmatmul.mubr.f32.gmra.mrb[0].mxu0 %v151
    %v225 = vpop.f32.mrb[0].mxu0
    %v226 = vadd.f32 %v48, %v225
    %v227 = vpop.f32.mrb[0].mxu0
    %228 = vmatprep.mubr.f32.mxu0 0.0
    %229 = vmatmul.mubr.f32.gmra.mrb[0].mxu0 %v153
    %v230 = vpop.f32.mrb[0].mxu0
    %v231 = vadd.f32 %v49, %v230
    %v232 = vpop.f32.mrb[0].mxu0
    %233 = vdwg.mxu0
    %v234 = vsel %vm150, %v226, -inf
    %235 = vmax.xlane.f32.xlu0 %v234
    %v236 = vpop.xlane.xlu0 %235
    %v237 = vsel %vm150, %v231, -inf
    %238 = vmax.xlane.f32.xlu0 %v237
    %v239 = vpop.xlane.xlu0 %238
    %v240 = vsub.f32 %v226, %v236
    %v241 = vsub.f32 %v231, %v239
    %v242 = vmul.f32 %v240, 1.442695
    %v243 = vpow.pop %v242
    %v244 = vmul.f32 %v241, 1.442695
    %v245 = vpow.pop %v244
    %v246 = vsel %vm150, %v243, 0.0
    %247 = vadd.xlane.f32.xlu0 %v246
    %v248 = vpop.xlane.xlu0 %247
    %v249 = vsel %vm150, %v245, 0.0
    %250 = vadd.xlane.f32.xlu0 %v249
    %v251 = vpop.xlane.xlu0 %250
    %v252 = vrcp.pop %v248
    %v253 = vrcp.pop %v251
    %v254 = vmul.f32 %v243, %v252
    %v255 = vmul.f32 %v245, %v253
    %256 = vrot.lane.b32.xlu0 %v135, 64
    %v257 = vpop.permute.xlu0 %256
    %258 = vrot.lane.b32.xlu0 %v140, 64
    %v259 = vpop.permute.xlu0 %258
    %v263 = vsel %vm150, %v254, 0
    %v266 = vsel %vm150, %v255, 0
    %268 = vmatprep.subr.mxu0 0.0
    %269 = vmatpush1.msra.mxu0 %v257
    %270 = vmatprep.subr.mxu0 0.0
    %271 = vmatpush1.msra.mxu0 %v259
    %272 = vmatprep.subr.mxu0 0.0
    %273 = vmatpush1.msra.mxu0 0.0
    %274 = vmatprep.subr.mxu0 0.0
    %275 = vmatpush1.msra.mxu0 0.0
    %276 = vmatprep.subr.mxu0 0.0
    %277 = vmatpush1.msra.mxu0 0.0
    %278 = vmatprep.subr.mxu0 0.0
    %279 = vmatpush1.msra.mxu0 0.0
    %280 = vmatprep.subr.mxu0 0.0
    %281 = vmatpush1.msra.mxu0 0.0
    %282 = vmatprep.subr.mxu0 0.0
    %283 = vmatpush1.msra.mxu0 0.0
    %284 = vmatprep.subr.mxu0 0.0
    %285 = vmatpush1.msra.mxu0 0.0
    %286 = vmatprep.subr.mxu0 0.0
    %287 = vmatpush1.msra.mxu0 0.0
    %288 = vmatprep.subr.mxu0 0.0
    %289 = vmatpush1.msra.mxu0 0.0
    %290 = vmatprep.subr.mxu0 0.0
    %291 = vmatpush1.msra.mxu0 0.0
    %292 = vmatprep.subr.mxu0 0.0
    %293 = vmatpush1.msra.mxu0 0.0
    %294 = vmatprep.subr.mxu0 0.0
    %295 = vmatpush1.msra.mxu0 0.0
    %296 = vmatprep.subr.mxu0 0.0
    %297 = vmatpush1.msra.mxu0 0.0
    %298 = vmatprep.subr.mxu0 0.0
    %299 = vmatpush1.msra.mxu0 0.0
    %300 = vmatprep.subr.mxu0 0.0
    %301 = vmatpush1.msra.mxu0 0.0
    %302 = vmatprep.subr.mxu0 0.0
    %303 = vmatpush1.msra.mxu0 0.0
    %304 = vmatprep.subr.mxu0 0.0
    %305 = vmatpush1.msra.mxu0 0.0
    %306 = vmatprep.subr.mxu0 0.0
    %307 = vmatpush1.msra.mxu0 0.0
    %308 = vmatprep.subr.mxu0 0.0
    %309 = vmatpush1.msra.mxu0 0.0
    %310 = vmatprep.subr.mxu0 0.0
    %311 = vmatpush1.msra.mxu0 0.0
    %312 = vmatprep.subr.mxu0 0.0
    %313 = vmatpush1.msra.mxu0 0.0
    %314 = vmatprep.subr.mxu0 0.0
    %315 = vmatpush1.msra.mxu0 0.0
    %316 = vmatprep.subr.mxu0 0.0
    %317 = vmatpush1.msra.mxu0 0.0
    %318 = vmatprep.subr.mxu0 0.0
    %319 = vmatpush1.msra.mxu0 0.0
    %320 = vmatprep.subr.mxu0 0.0
    %321 = vmatpush1.msra.mxu0 0.0
    %322 = vmatprep.subr.mxu0 0.0
    %323 = vmatpush1.msra.mxu0 0.0
    %324 = vmatprep.subr.mxu0 0.0
    %325 = vmatpush1.msra.mxu0 0.0
    %326 = vmatprep.subr.mxu0 0.0
    %327 = vmatpush1.msra.mxu0 0.0
    %328 = vmatprep.subr.mxu0 0.0
    %329 = vmatpush1.msra.mxu0 0.0
    %330 = vmatprep.subr.mxu0 0.0
    %331 = vmatpush1.msra.mxu0 0.0
    %332 = vmatprep.mubr.f32.mxu0 0.0
    %333 = vmatmul.mubr.f32.gmra.mrb[0].mxu0 %v263
    %v334 = vpop.f32.mrb[0].mxu0
    %v335 = vadd.f32 0.0, %v334
    %v336 = vpop.f32.mrb[0].mxu0
    %337 = vmatprep.mubr.f32.mxu0 0.0
    %338 = vmatmul.mubr.f32.gmra.mrb[0].mxu0 %v266
    %v339 = vpop.f32.mrb[0].mxu0
    %v340 = vadd.f32 0.0, %v339
    %v341 = vpop.f32.mrb[0].mxu0
    %342 = vdwg.mxu0
    %343 = vst.msk [vmem:[#allocation2] sm:$0xff] %vm150, %v335
    %344 = vst.msk [vmem:[#allocation2 + $0x8] sm:$0xff] %vm150, %v340
    %345 = vrot.lane.b32.xlu0 %v135, 112
    %v346 = vpop.permute.xlu0 %345
    %347 = vrot.lane.b32.xlu0 %v140, 112
    %v348 = vpop.permute.xlu0 %347
    %349 = vrot.lane.b32.xlu0 %v135, 80
    %v350 = vpop.permute.xlu0 %349
    %351 = vrot.lane.b32.xlu0 %v140, 80
    %v352 = vpop.permute.xlu0 %351
    %v353 = vsel %vm150, %v346, 0
    %v355 = vsel %vm150, %v348, 0
    %v357 = vsel %vm150, %v350, 0
    %v359 = vsel %vm150, %v352, 0
    %361 = vmatprep.subr.mxu0 0.0
    %362 = vmatpush1.xpose.msra.mxu0 %v357
    %363 = vmatprep.subr.mxu0 0.0
    %364 = vmatpush1.xpose.msra.mxu0 %v359
    %365 = vmatprep.subr.mxu0 0.0
    %366 = vmatpush1.xpose.msra.mxu0 0.0
    %367 = vmatprep.subr.mxu0 0.0
    %368 = vmatpush1.xpose.msra.mxu0 0.0
    %369 = vmatprep.subr.mxu0 0.0
    %370 = vmatpush1.xpose.msra.mxu0 0.0
    %371 = vmatprep.subr.mxu0 0.0
    %372 = vmatpush1.xpose.msra.mxu0 0.0
    %373 = vmatprep.subr.mxu0 0.0
    %374 = vmatpush1.xpose.msra.mxu0 0.0
    %375 = vmatprep.subr.mxu0 0.0
    %376 = vmatpush1.xpose.msra.mxu0 0.0
    %377 = vmatprep.subr.mxu0 0.0
    %378 = vmatpush1.xpose.msra.mxu0 0.0
    %379 = vmatprep.subr.mxu0 0.0
    %380 = vmatpush1.xpose.msra.mxu0 0.0
    %381 = vmatprep.subr.mxu0 0.0
    %382 = vmatpush1.xpose.msra.mxu0 0.0
    %383 = vmatprep.subr.mxu0 0.0
    %384 = vmatpush1.xpose.msra.mxu0 0.0
    %385 = vmatprep.subr.mxu0 0.0
    %386 = vmatpush1.xpose.msra.mxu0 0.0
    %387 = vmatprep.subr.mxu0 0.0
    %388 = vmatpush1.xpose.msra.mxu0 0.0
    %389 = vmatprep.subr.mxu0 0.0
    %390 = vmatpush1.xpose.msra.mxu0 0.0
    %391 = vmatprep.subr.mxu0 0.0
    %392 = vmatpush1.xpose.msra.mxu0 0.0
    %393 = vmatprep.subr.mxu0 0.0
    %394 = vmatpush1.xpose.msra.mxu0 0.0
    %395 = vmatprep.subr.mxu0 0.0
    %396 = vmatpush1.xpose.msra.mxu0 0.0
    %397 = vmatprep.subr.mxu0 0.0
    %398 = vmatpush1.xpose.msra.mxu0 0.0
    %399 = vmatprep.subr.mxu0 0.0
    %400 = vmatpush1.xpose.msra.mxu0 0.0
    %401 = vmatprep.subr.mxu0 0.0
    %402 = vmatpush1.xpose.msra.mxu0 0.0
    %403 = vmatprep.subr.mxu0 0.0
    %404 = vmatpush1.xpose.msra.mxu0 0.0
    %405 = vmatprep.subr.mxu0 0.0
    %406 = vmatpush1.xpose.msra.mxu0 0.0
    %407 = vmatprep.subr.mxu0 0.0
    %408 = vmatpush1.xpose.msra.mxu0 0.0
    %409 = vmatprep.subr.mxu0 0.0
    %410 = vmatpush1.xpose.msra.mxu0 0.0
    %411 = vmatprep.subr.mxu0 0.0
    %412 = vmatpush1.xpose.msra.mxu0 0.0
    %413 = vmatprep.subr.mxu0 0.0
    %414 = vmatpush1.xpose.msra.mxu0 0.0
    %415 = vmatprep.subr.mxu0 0.0
    %416 = vmatpush1.xpose.msra.mxu0 0.0
    %417 = vmatprep.subr.mxu0 0.0
    %418 = vmatpush1.xpose.msra.mxu0 0.0
    %419 = vmatprep.subr.mxu0 0.0
    %420 = vmatpush1.xpose.msra.mxu0 0.0
    %421 = vmatprep.subr.mxu0 0.0
    %422 = vmatpush1.xpose.msra.mxu0 0.0
    %423 = vmatprep.subr.mxu0 0.0
    %424 = vmatpush1.xpose.msra.mxu0 0.0
    %425 = vmatprep.mubr.f32.mxu0 0.0
    %426 = vmatmul.mubr.f32.gmra.mrb[0].mxu0 %v353
    %v427 = vpop.f32.mrb[0].mxu0
    %v428 = vadd.f32 %v48, %v427
    %v429 = vpop.f32.mrb[0].mxu0
    %430 = vmatprep.mubr.f32.mxu0 0.0
    %431 = vmatmul.mubr.f32.gmra.mrb[0].mxu0 %v355
    %v432 = vpop.f32.mrb[0].mxu0
    %v433 = vadd.f32 %v49, %v432
    %v434 = vpop.f32.mrb[0].mxu0
    %435 = vdwg.mxu0
    %v436 = vsel %vm150, %v428, -inf
    %437 = vmax.xlane.f32.xlu0 %v436
    %v438 = vpop.xlane.xlu0 %437
    %v439 = vsel %vm150, %v433, -inf
    %440 = vmax.xlane.f32.xlu0 %v439
    %v441 = vpop.xlane.xlu0 %440
    %v442 = vsub.f32 %v428, %v438
    %v443 = vsub.f32 %v433, %v441
    %v444 = vmul.f32 %v442, 1.442695
    %v445 = vpow.pop %v444
    %v446 = vmul.f32 %v443, 1.442695
    %v447 = vpow.pop %v446
    %v448 = vsel %vm150, %v445, 0.0
    %449 = vadd.xlane.f32.xlu0 %v448
    %v450 = vpop.xlane.xlu0 %449
    %v451 = vsel %vm150, %v447, 0.0
    %452 = vadd.xlane.f32.xlu0 %v451
    %v453 = vpop.xlane.xlu0 %452
    %v454 = vrcp.pop %v450
    %v455 = vrcp.pop %v453
    %v456 = vmul.f32 %v445, %v454
    %v457 = vmul.f32 %v447, %v455
    %458 = vrot.lane.b32.xlu0 %v135, 48
    %v459 = vpop.permute.xlu0 %458
    %460 = vrot.lane.b32.xlu0 %v140, 48
    %v461 = vpop.permute.xlu0 %460
    %v465 = vsel %vm150, %v456, 0
    %v468 = vsel %vm150, %v457, 0
    %470 = vmatprep.subr.mxu0 0.0
    %471 = vmatpush1.msra.mxu0 %v459
    %472 = vmatprep.subr.mxu0 0.0
    %473 = vmatpush1.msra.mxu0 %v461
    %474 = vmatprep.subr.mxu0 0.0
    %475 = vmatpush1.msra.mxu0 0.0
    %476 = vmatprep.subr.mxu0 0.0
    %477 = vmatpush1.msra.mxu0 0.0
    %478 = vmatprep.subr.mxu0 0.0
    %479 = vmatpush1.msra.mxu0 0.0
    %480 = vmatprep.subr.mxu0 0.0
    %481 = vmatpush1.msra.mxu0 0.0
    %482 = vmatprep.subr.mxu0 0.0
    %483 = vmatpush1.msra.mxu0 0.0
    %484 = vmatprep.subr.mxu0 0.0
    %485 = vmatpush1.msra.mxu0 0.0
    %486 = vmatprep.subr.mxu0 0.0
    %487 = vmatpush1.msra.mxu0 0.0
    %488 = vmatprep.subr.mxu0 0.0
    %489 = vmatpush1.msra.mxu0 0.0
    %490 = vmatprep.subr.mxu0 0.0
    %491 = vmatpush1.msra.mxu0 0.0
    %492 = vmatprep.subr.mxu0 0.0
    %493 = vmatpush1.msra.mxu0 0.0
    %494 = vmatprep.subr.mxu0 0.0
    %495 = vmatpush1.msra.mxu0 0.0
    %496 = vmatprep.subr.mxu0 0.0
    %497 = vmatpush1.msra.mxu0 0.0
    %498 = vmatprep.subr.mxu0 0.0
    %499 = vmatpush1.msra.mxu0 0.0
    %500 = vmatprep.subr.mxu0 0.0
    %501 = vmatpush1.msra.mxu0 0.0
    %502 = vmatprep.subr.mxu0 0.0
    %503 = vmatpush1.msra.mxu0 0.0
    %504 = vmatprep.subr.mxu0 0.0
    %505 = vmatpush1.msra.mxu0 0.0
    %506 = vmatprep.subr.mxu0 0.0
    %507 = vmatpush1.msra.mxu0 0.0
    %508 = vmatprep.subr.mxu0 0.0
    %509 = vmatpush1.msra.mxu0 0.0
    %510 = vmatprep.subr.mxu0 0.0
    %511 = vmatpush1.msra.mxu0 0.0
    %512 = vmatprep.subr.mxu0 0.0
    %513 = vmatpush1.msra.mxu0 0.0
    %514 = vmatprep.subr.mxu0 0.0
    %515 = vmatpush1.msra.mxu0 0.0
    %516 = vmatprep.subr.mxu0 0.0
    %517 = vmatpush1.msra.mxu0 0.0
    %518 = vmatprep.subr.mxu0 0.0
    %519 = vmatpush1.msra.mxu0 0.0
    %520 = vmatprep.subr.mxu0 0.0
    %521 = vmatpush1.msra.mxu0 0.0
    %522 = vmatprep.subr.mxu0 0.0
    %523 = vmatpush1.msra.mxu0 0.0
    %524 = vmatprep.subr.mxu0 0.0
    %525 = vmatpush1.msra.mxu0 0.0
    %526 = vmatprep.subr.mxu0 0.0
    %527 = vmatpush1.msra.mxu0 0.0
    %528 = vmatprep.subr.mxu0 0.0
    %529 = vmatpush1.msra.mxu0 0.0
    %530 = vmatprep.subr.mxu0 0.0
    %531 = vmatpush1.msra.mxu0 0.0
    %532 = vmatprep.subr.mxu0 0.0
    %533 = vmatpush1.msra.mxu0 0.0
    %534 = vmatprep.mubr.f32.mxu0 0.0
    %535 = vmatmul.mubr.f32.gmra.mrb[0].mxu0 %v465
    %v536 = vpop.f32.mrb[0].mxu0
    %v537 = vadd.f32 0.0, %v536
    %v538 = vpop.f32.mrb[0].mxu0
    %539 = vmatprep.mubr.f32.mxu0 0.0
    %540 = vmatmul.mubr.f32.gmra.mrb[0].mxu0 %v468
    %v541 = vpop.f32.mrb[0].mxu0
    %v542 = vadd.f32 0.0, %v541
    %v543 = vpop.f32.mrb[0].mxu0
    %544 = vdwg.mxu0
    %547 = vrot.lane.b32.xlu0 %v537, 16
    %v548 = vpop.permute.xlu0 %547
    %549 = vrot.lane.b32.xlu0 %v542, 16
    %v550 = vpop.permute.xlu0 %549
    %vm553 = vcmask 261248
    %554 = vst.msk [vmem:[#allocation2] sm:$0xff] %vm553, %v548
    %555 = vst.msk [vmem:[#allocation2 + $0x8] sm:$0xff] %vm553, %v550
    %v556 = vld [vmem:[#allocation2] sm:$0xff]
    %v557 = vld [vmem:[#allocation2 + $0x8] sm:$0xff]
    %v558 = vld [vmem:[%s5] sm:$0xff]
    %v559 = vld [vmem:[%s5 + $0x8] sm:$0xff]
    %v560 = vld [vmem:[%s5 + $0x10] sm:$0xff]
    %v561 = vld [vmem:[%s5 + $0x18] sm:$0xff]
    %v562 = vlaneseq
    %v563 = vshrl.u32 %v562, 7
    %v564 = vsub.s32 0, %v563
    %v565 = vrot.slane %v143, %v564
    %v567 = vsel %vm61, %v556, 0
    %v570 = vsel %vm61, %v557, 0
    %572 = vmatprep.subr.mxu0 0.0
    %573 = vmatpush1.msra.mxu0 %v558
    %574 = vmatprep.subr.mxu0 0.0
    %575 = vmatpush1.msra.mxu0 %v559
    %576 = vmatprep.subr.mxu0 0.0
    %577 = vmatpush1.msra.mxu0 %v560
    %578 = vmatprep.subr.mxu0 0.0
    %579 = vmatpush1.msra.mxu0 %v561
    %580 = vmatprep.subr.mxu0 0.0
    %581 = vmatpush1.msra.mxu0 0.0
    %582 = vmatprep.subr.mxu0 0.0
    %583 = vmatpush1.msra.mxu0 0.0
    %584 = vmatprep.subr.mxu0 0.0
    %585 = vmatpush1.msra.mxu0 0.0
    %586 = vmatprep.subr.mxu0 0.0
    %587 = vmatpush1.msra.mxu0 0.0
    %588 = vmatprep.subr.mxu0 0.0
    %589 = vmatpush1.msra.mxu0 0.0
    %590 = vmatprep.subr.mxu0 0.0
    %591 = vmatpush1.msra.mxu0 0.0
    %592 = vmatprep.subr.mxu0 0.0
    %593 = vmatpush1.msra.mxu0 0.0
    %594 = vmatprep.subr.mxu0 0.0
    %595 = vmatpush1.msra.mxu0 0.0
    %596 = vmatprep.subr.mxu0 0.0
    %597 = vmatpush1.msra.mxu0 0.0
    %598 = vmatprep.subr.mxu0 0.0
    %599 = vmatpush1.msra.mxu0 0.0
    %600 = vmatprep.subr.mxu0 0.0
    %601 = vmatpush1.msra.mxu0 0.0
    %602 = vmatprep.subr.mxu0 0.0
    %603 = vmatpush1.msra.mxu0 0.0
    %604 = vmatprep.subr.mxu0 0.0
    %605 = vmatpush1.msra.mxu0 0.0
    %606 = vmatprep.subr.mxu0 0.0
    %607 = vmatpush1.msra.mxu0 0.0
    %608 = vmatprep.subr.mxu0 0.0
    %609 = vmatpush1.msra.mxu0 0.0
    %610 = vmatprep.subr.mxu0 0.0
    %611 = vmatpush1.msra.mxu0 0.0
    %612 = vmatprep.subr.mxu0 0.0
    %613 = vmatpush1.msra.mxu0 0.0
    %614 = vmatprep.subr.mxu0 0.0
    %615 = vmatpush1.msra.mxu0 0.0
    %616 = vmatprep.subr.mxu0 0.0
    %617 = vmatpush1.msra.mxu0 0.0
    %618 = vmatprep.subr.mxu0 0.0
    %619 = vmatpush1.msra.mxu0 0.0
    %620 = vmatprep.subr.mxu0 0.0
    %621 = vmatpush1.msra.mxu0 0.0
    %622 = vmatprep.subr.mxu0 0.0
    %623 = vmatpush1.msra.mxu0 0.0
    %624 = vmatprep.subr.mxu0 0.0
    %625 = vmatpush1.msra.mxu0 0.0
    %626 = vmatprep.subr.mxu0 0.0
    %627 = vmatpush1.msra.mxu0 0.0
    %628 = vmatprep.subr.mxu0 0.0
    %629 = vmatpush1.msra.mxu0 0.0
    %630 = vmatprep.subr.mxu0 0.0
    %631 = vmatpush1.msra.mxu0 0.0
    %632 = vmatprep.subr.mxu0 0.0
    %633 = vmatpush1.msra.mxu0 0.0
    %634 = vmatprep.subr.mxu0 0.0
    %635 = vmatpush1.msra.mxu0 0.0
    %636 = vmatprep.mubr.f32.mxu0 0.0
    %637 = vmatmul.mubr.f32.gmra.mrb[0].mxu0 %v567
    %v638 = vpop.f32.mrb[0].mxu0
    %v639 = vadd.f32 %v565, %v638
    %v640 = vpop.f32.mrb[0].mxu0
    %641 = vmatprep.mubr.f32.mxu0 0.0
    %642 = vmatmul.mubr.f32.gmra.mrb[0].mxu0 %v570
    %v643 = vpop.f32.mrb[0].mxu0
    %v644 = vadd.f32 %v565, %v643
    %v645 = vpop.f32.mrb[0].mxu0
    %646 = vdwg.mxu0
    %v647 = vadd.f32 %v46, %v639
    %v648 = vadd.f32 %v47, %v644
    %v649 = vsel %vm61, %v647, 0.0
    %650 = vadd.xlane.f32.xlu0 %v649
    %v651 = vpop.xlane.xlu0 %650
    %v652 = vsel %vm61, %v648, 0.0
    %653 = vadd.xlane.f32.xlu0 %v652
    %v654 = vpop.xlane.xlu0 %653
    %v655 = vrcp.pop 32.0
    %v656 = vmul.f32 %v651, %v655
    %v657 = vmul.f32 %v654, %v655
    %v658 = vsub.f32 %v647, %v656
    %v659 = vsub.f32 %v648, %v657
    %v660 = vmul.f32 %v658, %v658
    %v661 = vmul.f32 %v659, %v659
    %v662 = vsel %vm61, %v660, 0.0
    %663 = vadd.xlane.f32.xlu0 %v662
    %v664 = vpop.xlane.xlu0 %663
    %v665 = vsel %vm61, %v661, 0.0
    %666 = vadd.xlane.f32.xlu0 %v665
    %v667 = vpop.xlane.xlu0 %666
    %v668 = vmul.f32 %v664, %v655
    %v669 = vmul.f32 %v667, %v655
    %v670 = vadd.f32 %v668, 1e-06
    %v671 = vadd.f32 %v669, 1e-06
    %v672 = vrsqrt.pop %v670
    %v673 = vrsqrt.pop %v671
    %v674 = vmul.f32 %v658, %v672
    %v675 = vmul.f32 %v659, %v673
    %v676 = vlaneseq
    %v677 = vshrl.u32 %v676, 7
    %v678 = vsub.s32 2, %v677
    %v679 = vrot.slane %v143, %v678
    %v680 = vmul.f32 %v674, %v679
    %v681 = vmul.f32 %v675, %v679
    %v682 = vlaneseq
    %v683 = vshrl.u32 %v682, 7
    %v684 = vsub.s32 3, %v683
    %v685 = vrot.slane %v143, %v684
    %v686 = vadd.f32 %v680, %v685
    %v687 = vadd.f32 %v681, %v685
    %v688 = vld [vmem:[%s6] sm:$0xff]
    %v689 = vld [vmem:[%s6 + $0x8] sm:$0xff]
    %v690 = vld [vmem:[%s6 + $0x10] sm:$0xff]
    %v691 = vld [vmem:[%s6 + $0x18] sm:$0xff]
    %v692 = vld [vmem:[%s7] sm:$0x1]
    %v694 = vlaneseq
    %v695 = vshrl.u32 %v694, 7
    %v696 = vsub.s32 0, %v695
    %v697 = vrot.slane %v692, %v696
    %v700 = vsel %vm61, %v686, 0
    %v703 = vsel %vm61, %v687, 0
    %705 = vmatprep.subr.mxu0 0.0
    %706 = vmatpush1.msra.mxu0 %v688
    %707 = vmatprep.subr.mxu0 0.0
    %708 = vmatpush1.msra.mxu0 %v689
    %709 = vmatprep.subr.mxu0 0.0
    %710 = vmatpush1.msra.mxu0 %v690
    %711 = vmatprep.subr.mxu0 0.0
    %712 = vmatpush1.msra.mxu0 %v691
    %713 = vmatprep.subr.mxu0 0.0
    %714 = vmatpush1.msra.mxu0 0.0
    %715 = vmatprep.subr.mxu0 0.0
    %716 = vmatpush1.msra.mxu0 0.0
    %717 = vmatprep.subr.mxu0 0.0
    %718 = vmatpush1.msra.mxu0 0.0
    %719 = vmatprep.subr.mxu0 0.0
    %720 = vmatpush1.msra.mxu0 0.0
    %721 = vmatprep.subr.mxu0 0.0
    %722 = vmatpush1.msra.mxu0 0.0
    %723 = vmatprep.subr.mxu0 0.0
    %724 = vmatpush1.msra.mxu0 0.0
    %725 = vmatprep.subr.mxu0 0.0
    %726 = vmatpush1.msra.mxu0 0.0
    %727 = vmatprep.subr.mxu0 0.0
    %728 = vmatpush1.msra.mxu0 0.0
    %729 = vmatprep.subr.mxu0 0.0
    %730 = vmatpush1.msra.mxu0 0.0
    %731 = vmatprep.subr.mxu0 0.0
    %732 = vmatpush1.msra.mxu0 0.0
    %733 = vmatprep.subr.mxu0 0.0
    %734 = vmatpush1.msra.mxu0 0.0
    %735 = vmatprep.subr.mxu0 0.0
    %736 = vmatpush1.msra.mxu0 0.0
    %737 = vmatprep.subr.mxu0 0.0
    %738 = vmatpush1.msra.mxu0 0.0
    %739 = vmatprep.subr.mxu0 0.0
    %740 = vmatpush1.msra.mxu0 0.0
    %741 = vmatprep.subr.mxu0 0.0
    %742 = vmatpush1.msra.mxu0 0.0
    %743 = vmatprep.subr.mxu0 0.0
    %744 = vmatpush1.msra.mxu0 0.0
    %745 = vmatprep.subr.mxu0 0.0
    %746 = vmatpush1.msra.mxu0 0.0
    %747 = vmatprep.subr.mxu0 0.0
    %748 = vmatpush1.msra.mxu0 0.0
    %749 = vmatprep.subr.mxu0 0.0
    %750 = vmatpush1.msra.mxu0 0.0
    %751 = vmatprep.subr.mxu0 0.0
    %752 = vmatpush1.msra.mxu0 0.0
    %753 = vmatprep.subr.mxu0 0.0
    %754 = vmatpush1.msra.mxu0 0.0
    %755 = vmatprep.subr.mxu0 0.0
    %756 = vmatpush1.msra.mxu0 0.0
    %757 = vmatprep.subr.mxu0 0.0
    %758 = vmatpush1.msra.mxu0 0.0
    %759 = vmatprep.subr.mxu0 0.0
    %760 = vmatpush1.msra.mxu0 0.0
    %761 = vmatprep.subr.mxu0 0.0
    %762 = vmatpush1.msra.mxu0 0.0
    %763 = vmatprep.subr.mxu0 0.0
    %764 = vmatpush1.msra.mxu0 0.0
    %765 = vmatprep.subr.mxu0 0.0
    %766 = vmatpush1.msra.mxu0 0.0
    %767 = vmatprep.subr.mxu0 0.0
    %768 = vmatpush1.msra.mxu0 0.0
    %769 = vmatprep.mubr.f32.mxu0 0.0
    %770 = vmatmul.mubr.f32.gmra.mrb[0].mxu0 %v700
    %v771 = vpop.f32.mrb[0].mxu0
    %v772 = vadd.f32 %v697, %v771
    %v773 = vpop.f32.mrb[0].mxu0
    %774 = vmatprep.mubr.f32.mxu0 0.0
    %775 = vmatmul.mubr.f32.gmra.mrb[0].mxu0 %v703
    %v776 = vpop.f32.mrb[0].mxu0
    %v777 = vadd.f32 %v697, %v776
    %v778 = vpop.f32.mrb[0].mxu0
    %779 = vdwg.mxu0
    %v780 = vmul.f32 %v772, %v772
    %v781 = vmul.f32 %v777, %v777
    %v782 = vmul.f32 %v772, %v780
    %v783 = vmul.f32 %v777, %v781
    %v784 = vmul.f32 %v782, 0.044715
    %v785 = vmul.f32 %v783, 0.044715
    %v786 = vadd.f32 %v772, %v784
    %v787 = vadd.f32 %v777, %v785
    %v788 = vmul.f32 %v786, 0.7978846
    %v789 = vmul.f32 %v787, 0.7978846
    %v790 = vtanh.pop %v788
    %v791 = vtanh.pop %v789
    %v792 = vadd.f32 %v790, 1.0
    %v793 = vadd.f32 %v791, 1.0
    %v794 = vmul.f32 %v792, 0.5
    %v795 = vmul.f32 %v793, 0.5
    %v796 = vmul.f32 %v772, %v794
    %v797 = vmul.f32 %v777, %v795
    %v798 = vld [vmem:[%s8] sm:$0xff]
    %v799 = vld [vmem:[%s8 + $0x8] sm:$0xff]
    %v800 = vld [vmem:[%s8 + $0x10] sm:$0xff]
    %v801 = vld [vmem:[%s8 + $0x18] sm:$0xff]
    %v802 = vld [vmem:[%s8 + $0x20] sm:$0xff]
    %v803 = vld [vmem:[%s8 + $0x28] sm:$0xff]
    %v804 = vld [vmem:[%s8 + $0x30] sm:$0xff]
    %v805 = vld [vmem:[%s8 + $0x38] sm:$0xff]
    %v806 = vlaneseq
    %v807 = vshrl.u32 %v806, 7
    %v808 = vsub.s32 1, %v807
    %v809 = vrot.slane %v143, %v808
    %vm810 = vcmask 523264
    %v812 = vsel %vm810, %v796, 0
    %v815 = vsel %vm810, %v797, 0
    %817 = vmatprep.subr.mxu0 0.0
    %818 = vmatpush1.msra.mxu0 %v798
    %819 = vmatprep.subr.mxu0 0.0
    %820 = vmatpush1.msra.mxu0 %v799
    %821 = vmatprep.subr.mxu0 0.0
    %822 = vmatpush1.msra.mxu0 %v800
    %823 = vmatprep.subr.mxu0 0.0
    %824 = vmatpush1.msra.mxu0 %v801
    %825 = vmatprep.subr.mxu0 0.0
    %826 = vmatpush1.msra.mxu0 %v802
    %827 = vmatprep.subr.mxu0 0.0
    %828 = vmatpush1.msra.mxu0 %v803
    %829 = vmatprep.subr.mxu0 0.0
    %830 = vmatpush1.msra.mxu0 %v804
    %831 = vmatprep.subr.mxu0 0.0
    %832 = vmatpush1.msra.mxu0 %v805
    %833 = vmatprep.subr.mxu0 0.0
    %834 = vmatpush1.msra.mxu0 0.0
    %835 = vmatprep.subr.mxu0 0.0
    %836 = vmatpush1.msra.mxu0 0.0
    %837 = vmatprep.subr.mxu0 0.0
    %838 = vmatpush1.msra.mxu0 0.0
    %839 = vmatprep.subr.mxu0 0.0
    %840 = vmatpush1.msra.mxu0 0.0
    %841 = vmatprep.subr.mxu0 0.0
    %842 = vmatpush1.msra.mxu0 0.0
    %843 = vmatprep.subr.mxu0 0.0
    %844 = vmatpush1.msra.mxu0 0.0
    %845 = vmatprep.subr.mxu0 0.0
    %846 = vmatpush1.msra.mxu0 0.0
    %847 = vmatprep.subr.mxu0 0.0
    %848 = vmatpush1.msra.mxu0 0.0
    %849 = vmatprep.subr.mxu0 0.0
    %850 = vmatpush1.msra.mxu0 0.0
    %851 = vmatprep.subr.mxu0 0.0
    %852 = vmatpush1.msra.mxu0 0.0
    %853 = vmatprep.subr.mxu0 0.0
    %854 = vmatpush1.msra.mxu0 0.0
    %855 = vmatprep.subr.mxu0 0.0
    %856 = vmatpush1.msra.mxu0 0.0
    %857 = vmatprep.subr.mxu0 0.0
    %858 = vmatpush1.msra.mxu0 0.0
    %859 = vmatprep.subr.mxu0 0.0
    %860 = vmatpush1.msra.mxu0 0.0
    %861 = vmatprep.subr.mxu0 0.0
    %862 = vmatpush1.msra.mxu0 0.0
    %863 = vmatprep.subr.mxu0 0.0
    %864 = vmatpush1.msra.mxu0 0.0
    %865 = vmatprep.subr.mxu0 0.0
    %866 = vmatpush1.msra.mxu0 0.0
    %867 = vmatprep.subr.mxu0 0.0
    %868 = vmatpush1.msra.mxu0 0.0
    %869 = vmatprep.subr.mxu0 0.0
    %870 = vmatpush1.msra.mxu0 0.0
    %871 = vmatprep.subr.mxu0 0.0
    %872 = vmatpush1.msra.mxu0 0.0
    %873 = vmatprep.subr.mxu0 0.0
    %874 = vmatpush1.msra.mxu0 0.0
    %875 = vmatprep.subr.mxu0 0.0
    %876 = vmatpush1.msra.mxu0 0.0
    %877 = vmatprep.subr.mxu0 0.0
    %878 = vmatpush1.msra.mxu0 0.0
    %879 = vmatprep.subr.mxu0 0.0
    %880 = vmatpush1.msra.mxu0 0.0
    %881 = vmatprep.mubr.f32.mxu0 0.0
    %882 = vmatmul.mubr.f32.gmra.mrb[0].mxu0 %v812
    %v883 = vpop.f32.mrb[0].mxu0
    %v884 = vadd.f32 %v809, %v883
    %v885 = vpop.f32.mrb[0].mxu0
    %886 = vmatprep.mubr.f32.mxu0 0.0
    %887 = vmatmul.mubr.f32.gmra.mrb[0].mxu0 %v815
    %v888 = vpop.f32.mrb[0].mxu0
    %v889 = vadd.f32 %v809, %v888
    %v890 = vpop.f32.mrb[0].mxu0
    %891 = vdwg.mxu0
    %v892 = vadd.f32 %v686, %v884
    %v893 = vadd.f32 %v687, %v889
    %v894 = vsel %vm61, %v892, 0.0
    %895 = vadd.xlane.f32.xlu0 %v894
    %v896 = vpop.xlane.xlu0 %895
    %v897 = vsel %vm61, %v893, 0.0
    %898 = vadd.xlane.f32.xlu0 %v897
    %v899 = vpop.xlane.xlu0 %898
    %v900 = vmul.f32 %v896, %v655
    %v901 = vmul.f32 %v899, %v655
    %v902 = vsub.f32 %v892, %v900
    %v903 = vsub.f32 %v893, %v901
    %v904 = vmul.f32 %v902, %v902
    %v905 = vmul.f32 %v903, %v903
    %v906 = vsel %vm61, %v904, 0.0
    %907 = vadd.xlane.f32.xlu0 %v906
    %v908 = vpop.xlane.xlu0 %907
    %v909 = vsel %vm61, %v905, 0.0
    %910 = vadd.xlane.f32.xlu0 %v909
    %v911 = vpop.xlane.xlu0 %910
    %v912 = vmul.f32 %v908, %v655
    %v913 = vmul.f32 %v911, %v655
    %v914 = vadd.f32 %v912, 1e-06
    %v915 = vadd.f32 %v913, 1e-06
    %v916 = vrsqrt.pop %v914
    %v917 = vrsqrt.pop %v915
    %v918 = vmul.f32 %v902, %v916
    %v919 = vmul.f32 %v903, %v917
    %v920 = vlaneseq
    %v921 = vshrl.u32 %v920, 7
    %v922 = vsub.s32 4, %v921
    %v923 = vrot.slane %v143, %v922
    %v924 = vmul.f32 %v918, %v923
    %v925 = vmul.f32 %v919, %v923
    %v926 = vlaneseq
    %v927 = vshrl.u32 %v926, 7
    %v928 = vsub.s32 5, %v927
    %v929 = vrot.slane %v143, %v928
    %v930 = vadd.f32 %v924, %v929
    %v931 = vadd.f32 %v925, %v929
    %s932 = scalar_lea.vmem %s3, 32
    %v933 = vld [vmem:[%s932] sm:$0xff]
    %v934 = vld [vmem:[%s932 + $0x8] sm:$0xff]
    %v935 = vld [vmem:[%s932 + $0x10] sm:$0xff]
    %v936 = vld [vmem:[%s932 + $0x18] sm:$0xff]
    %s937 = scalar_lea.vmem %s4, 1
    %v938 = vld [vmem:[%s937] sm:$0x1]
    %v940 = vlaneseq
    %v941 = vshrl.u32 %v940, 7
    %v942 = vsub.s32 0, %v941
    %v943 = vrot.slane %v938, %v942
    %v946 = vsel %vm61, %v930, 0
    %v949 = vsel %vm61, %v931, 0
    %951 = vmatprep.subr.mxu0 0.0
    %952 = vmatpush1.msra.mxu0 %v933
    %953 = vmatprep.subr.mxu0 0.0
    %954 = vmatpush1.msra.mxu0 %v934
    %955 = vmatprep.subr.mxu0 0.0
    %956 = vmatpush1.msra.mxu0 %v935
    %957 = vmatprep.subr.mxu0 0.0
    %958 = vmatpush1.msra.mxu0 %v936
    %959 = vmatprep.subr.mxu0 0.0
    %960 = vmatpush1.msra.mxu0 0.0
    %961 = vmatprep.subr.mxu0 0.0
    %962 = vmatpush1.msra.mxu0 0.0
    %963 = vmatprep.subr.mxu0 0.0
    %964 = vmatpush1.msra.mxu0 0.0
    %965 = vmatprep.subr.mxu0 0.0
    %966 = vmatpush1.msra.mxu0 0.0
    %967 = vmatprep.subr.mxu0 0.0
    %968 = vmatpush1.msra.mxu0 0.0
    %969 = vmatprep.subr.mxu0 0.0
    %970 = vmatpush1.msra.mxu0 0.0
    %971 = vmatprep.subr.mxu0 0.0
    %972 = vmatpush1.msra.mxu0 0.0
    %973 = vmatprep.subr.mxu0 0.0
    %974 = vmatpush1.msra.mxu0 0.0
    %975 = vmatprep.subr.mxu0 0.0
    %976 = vmatpush1.msra.mxu0 0.0
    %977 = vmatprep.subr.mxu0 0.0
    %978 = vmatpush1.msra.mxu0 0.0
    %979 = vmatprep.subr.mxu0 0.0
    %980 = vmatpush1.msra.mxu0 0.0
    %981 = vmatprep.subr.mxu0 0.0
    %982 = vmatpush1.msra.mxu0 0.0
    %983 = vmatprep.subr.mxu0 0.0
    %984 = vmatpush1.msra.mxu0 0.0
    %985 = vmatprep.subr.mxu0 0.0
    %986 = vmatpush1.msra.mxu0 0.0
    %987 = vmatprep.subr.mxu0 0.0
    %988 = vmatpush1.msra.mxu0 0.0
    %989 = vmatprep.subr.mxu0 0.0
    %990 = vmatpush1.msra.mxu0 0.0
    %991 = vmatprep.subr.mxu0 0.0
    %992 = vmatpush1.msra.mxu0 0.0
    %993 = vmatprep.subr.mxu0 0.0
    %994 = vmatpush1.msra.mxu0 0.0
    %995 = vmatprep.subr.mxu0 0.0
    %996 = vmatpush1.msra.mxu0 0.0
    %997 = vmatprep.subr.mxu0 0.0
    %998 = vmatpush1.msra.mxu0 0.0
    %999 = vmatprep.subr.mxu0 0.0
    %1000 = vmatpush1.msra.mxu0 0.0
    %1001 = vmatprep.subr.mxu0 0.0
    %1002 = vmatpush1.msra.mxu0 0.0
    %1003 = vmatprep.subr.mxu0 0.0
    %1004 = vmatpush1.msra.mxu0 0.0
    %1005 = vmatprep.subr.mxu0 0.0
    %1006 = vmatpush1.msra.mxu0 0.0
    %1007 = vmatprep.subr.mxu0 0.0
    %1008 = vmatpush1.msra.mxu0 0.0
    %1009 = vmatprep.subr.mxu0 0.0
    %1010 = vmatpush1.msra.mxu0 0.0
    %1011 = vmatprep.subr.mxu0 0.0
    %1012 = vmatpush1.msra.mxu0 0.0
    %1013 = vmatprep.subr.mxu0 0.0
    %1014 = vmatpush1.msra.mxu0 0.0
    %1015 = vmatprep.mubr.f32.mxu0 0.0
    %1016 = vmatmul.mubr.f32.gmra.mrb[0].mxu0 %v946
    %v1017 = vpop.f32.mrb[0].mxu0
    %v1018 = vadd.f32 %v943, %v1017
    %v1019 = vpop.f32.mrb[0].mxu0
    %1020 = vmatprep.mubr.f32.mxu0 0.0
    %1021 = vmatmul.mubr.f32.gmra.mrb[0].mxu0 %v949
    %v1022 = vpop.f32.mrb[0].mxu0
    %v1023 = vadd.f32 %v943, %v1022
    %v1024 = vpop.f32.mrb[0].mxu0
    %1025 = vdwg.mxu0
    %s1026 = scalar_lea.vmem %s9, 8
    %v1027 = vld [vmem:[%s1026] sm:$0x3f]
    %1030 = vrot.lane.b32.xlu0 %v1018, 96
    %v1031 = vpop.permute.xlu0 %1030
    %1032 = vrot.lane.b32.xlu0 %v1023, 96
    %v1033 = vpop.permute.xlu0 %1032
    %v1034 = vsel %vm150, %v1018, 0
    %v1036 = vsel %vm150, %v1023, 0
    %v1038 = vsel %vm150, %v1031, 0
    %v1040 = vsel %vm150, %v1033, 0
    %1042 = vmatprep.subr.mxu0 0.0
    %1043 = vmatpush1.xpose.msra.mxu0 %v1038
    %1044 = vmatprep.subr.mxu0 0.0
    %1045 = vmatpush1.xpose.msra.mxu0 %v1040
    %1046 = vmatprep.subr.mxu0 0.0
    %1047 = vmatpush1.xpose.msra.mxu0 0.0
    %1048 = vmatprep.subr.mxu0 0.0
    %1049 = vmatpush1.xpose.msra.mxu0 0.0
    %1050 = vmatprep.subr.mxu0 0.0
    %1051 = vmatpush1.xpose.msra.mxu0 0.0
    %1052 = vmatprep.subr.mxu0 0.0
    %1053 = vmatpush1.xpose.msra.mxu0 0.0
    %1054 = vmatprep.subr.mxu0 0.0
    %1055 = vmatpush1.xpose.msra.mxu0 0.0
    %1056 = vmatprep.subr.mxu0 0.0
    %1057 = vmatpush1.xpose.msra.mxu0 0.0
    %1058 = vmatprep.subr.mxu0 0.0
    %1059 = vmatpush1.xpose.msra.mxu0 0.0
    %1060 = vmatprep.subr.mxu0 0.0
    %1061 = vmatpush1.xpose.msra.mxu0 0.0
    %1062 = vmatprep.subr.mxu0 0.0
    %1063 = vmatpush1.xpose.msra.mxu0 0.0
    %1064 = vmatprep.subr.mxu0 0.0
    %1065 = vmatpush1.xpose.msra.mxu0 0.0
    %1066 = vmatprep.subr.mxu0 0.0
    %1067 = vmatpush1.xpose.msra.mxu0 0.0
    %1068 = vmatprep.subr.mxu0 0.0
    %1069 = vmatpush1.xpose.msra.mxu0 0.0
    %1070 = vmatprep.subr.mxu0 0.0
    %1071 = vmatpush1.xpose.msra.mxu0 0.0
    %1072 = vmatprep.subr.mxu0 0.0
    %1073 = vmatpush1.xpose.msra.mxu0 0.0
    %1074 = vmatprep.subr.mxu0 0.0
    %1075 = vmatpush1.xpose.msra.mxu0 0.0
    %1076 = vmatprep.subr.mxu0 0.0
    %1077 = vmatpush1.xpose.msra.mxu0 0.0
    %1078 = vmatprep.subr.mxu0 0.0
    %1079 = vmatpush1.xpose.msra.mxu0 0.0
    %1080 = vmatprep.subr.mxu0 0.0
    %1081 = vmatpush1.xpose.msra.mxu0 0.0
    %1082 = vmatprep.subr.mxu0 0.0
    %1083 = vmatpush1.xpose.msra.mxu0 0.0
    %1084 = vmatprep.subr.mxu0 0.0
    %1085 = vmatpush1.xpose.msra.mxu0 0.0
    %1086 = vmatprep.subr.mxu0 0.0
    %1087 = vmatpush1.xpose.msra.mxu0 0.0
    %1088 = vmatprep.subr.mxu0 0.0
    %1089 = vmatpush1.xpose.msra.mxu0 0.0
    %1090 = vmatprep.subr.mxu0 0.0
    %1091 = vmatpush1.xpose.msra.mxu0 0.0
    %1092 = vmatprep.subr.mxu0 0.0
    %1093 = vmatpush1.xpose.msra.mxu0 0.0
    %1094 = vmatprep.subr.mxu0 0.0
    %1095 = vmatpush1.xpose.msra.mxu0 0.0
    %1096 = vmatprep.subr.mxu0 0.0
    %1097 = vmatpush1.xpose.msra.mxu0 0.0
    %1098 = vmatprep.subr.mxu0 0.0
    %1099 = vmatpush1.xpose.msra.mxu0 0.0
    %1100 = vmatprep.subr.mxu0 0.0
    %1101 = vmatpush1.xpose.msra.mxu0 0.0
    %1102 = vmatprep.subr.mxu0 0.0
    %1103 = vmatpush1.xpose.msra.mxu0 0.0
    %1104 = vmatprep.subr.mxu0 0.0
    %1105 = vmatpush1.xpose.msra.mxu0 0.0
    %1106 = vmatprep.mubr.f32.mxu0 0.0
    %1107 = vmatmul.mubr.f32.gmra.mrb[0].mxu0 %v1034
    %v1108 = vpop.f32.mrb[0].mxu0
    %v1109 = vadd.f32 %v48, %v1108
    %v1110 = vpop.f32.mrb[0].mxu0
    %1111 = vmatprep.mubr.f32.mxu0 0.0
    %1112 = vmatmul.mubr.f32.gmra.mrb[0].mxu0 %v1036
    %v1113 = vpop.f32.mrb[0].mxu0
    %v1114 = vadd.f32 %v49, %v1113
    %v1115 = vpop.f32.mrb[0].mxu0
    %1116 = vdwg.mxu0
    %v1117 = vsel %vm150, %v1109, -inf
    %1118 = vmax.xlane.f32.xlu0 %v1117
    %v1119 = vpop.xlane.xlu0 %1118
    %v1120 = vsel %vm150, %v1114, -inf
    %1121 = vmax.xlane.f32.xlu0 %v1120
    %v1122 = vpop.xlane.xlu0 %1121
    %v1123 = vsub.f32 %v1109, %v1119
    %v1124 = vsub.f32 %v1114, %v1122
    %v1125 = vmul.f32 %v1123, 1.442695
    %v1126 = vpow.pop %v1125
    %v1127 = vmul.f32 %v1124, 1.442695
    %v1128 = vpow.pop %v1127
    %v1129 = vsel %vm150, %v1126, 0.0
    %1130 = vadd.xlane.f32.xlu0 %v1129
    %v1131 = vpop.xlane.xlu0 %1130
    %v1132 = vsel %vm150, %v1128, 0.0
    %1133 = vadd.xlane.f32.xlu0 %v1132
    %v1134 = vpop.xlane.xlu0 %1133
    %v1135 = vrcp.pop %v1131
    %v1136 = vrcp.pop %v1134
    %v1137 = vmul.f32 %v1126, %v1135
    %v1138 = vmul.f32 %v1128, %v1136
    %1139 = vrot.lane.b32.xlu0 %v1018, 64
    %v1140 = vpop.permute.xlu0 %1139
    %1141 = vrot.lane.b32.xlu0 %v1023, 64
    %v1142 = vpop.permute.xlu0 %1141
    %v1146 = vsel %vm150, %v1137, 0
    %v1149 = vsel %vm150, %v1138, 0
    %1151 = vmatprep.subr.mxu0 0.0
    %1152 = vmatpush1.msra.mxu0 %v1140
    %1153 = vmatprep.subr.mxu0 0.0
    %1154 = vmatpush1.msra.mxu0 %v1142
    %1155 = vmatprep.subr.mxu0 0.0
    %1156 = vmatpush1.msra.mxu0 0.0
    %1157 = vmatprep.subr.mxu0 0.0
    %1158 = vmatpush1.msra.mxu0 0.0
    %1159 = vmatprep.subr.mxu0 0.0
    %1160 = vmatpush1.msra.mxu0 0.0
    %1161 = vmatprep.subr.mxu0 0.0
    %1162 = vmatpush1.msra.mxu0 0.0
    %1163 = vmatprep.subr.mxu0 0.0
    %1164 = vmatpush1.msra.mxu0 0.0
    %1165 = vmatprep.subr.mxu0 0.0
    %1166 = vmatpush1.msra.mxu0 0.0
    %1167 = vmatprep.subr.mxu0 0.0
    %1168 = vmatpush1.msra.mxu0 0.0
    %1169 = vmatprep.subr.mxu0 0.0
    %1170 = vmatpush1.msra.mxu0 0.0
    %1171 = vmatprep.subr.mxu0 0.0
    %1172 = vmatpush1.msra.mxu0 0.0
    %1173 = vmatprep.subr.mxu0 0.0
    %1174 = vmatpush1.msra.mxu0 0.0
    %1175 = vmatprep.subr.mxu0 0.0
    %1176 = vmatpush1.msra.mxu0 0.0
    %1177 = vmatprep.subr.mxu0 0.0
    %1178 = vmatpush1.msra.mxu0 0.0
    %1179 = vmatprep.subr.mxu0 0.0
    %1180 = vmatpush1.msra.mxu0 0.0
    %1181 = vmatprep.subr.mxu0 0.0
    %1182 = vmatpush1.msra.mxu0 0.0
    %1183 = vmatprep.subr.mxu0 0.0
    %1184 = vmatpush1.msra.mxu0 0.0
    %1185 = vmatprep.subr.mxu0 0.0
    %1186 = vmatpush1.msra.mxu0 0.0
    %1187 = vmatprep.subr.mxu0 0.0
    %1188 = vmatpush1.msra.mxu0 0.0
    %1189 = vmatprep.subr.mxu0 0.0
    %1190 = vmatpush1.msra.mxu0 0.0
    %1191 = vmatprep.subr.mxu0 0.0
    %1192 = vmatpush1.msra.mxu0 0.0
    %1193 = vmatprep.subr.mxu0 0.0
    %1194 = vmatpush1.msra.mxu0 0.0
    %1195 = vmatprep.subr.mxu0 0.0
    %1196 = vmatpush1.msra.mxu0 0.0
    %1197 = vmatprep.subr.mxu0 0.0
    %1198 = vmatpush1.msra.mxu0 0.0
    %1199 = vmatprep.subr.mxu0 0.0
    %1200 = vmatpush1.msra.mxu0 0.0
    %1201 = vmatprep.subr.mxu0 0.0
    %1202 = vmatpush1.msra.mxu0 0.0
    %1203 = vmatprep.subr.mxu0 0.0
    %1204 = vmatpush1.msra.mxu0 0.0
    %1205 = vmatprep.subr.mxu0 0.0
    %1206 = vmatpush1.msra.mxu0 0.0
    %1207 = vmatprep.subr.mxu0 0.0
    %1208 = vmatpush1.msra.mxu0 0.0
    %1209 = vmatprep.subr.mxu0 0.0
    %1210 = vmatpush1.msra.mxu0 0.0
    %1211 = vmatprep.subr.mxu0 0.0
    %1212 = vmatpush1.msra.mxu0 0.0
    %1213 = vmatprep.subr.mxu0 0.0
    %1214 = vmatpush1.msra.mxu0 0.0
    %1215 = vmatprep.mubr.f32.mxu0 0.0
    %1216 = vmatmul.mubr.f32.gmra.mrb[0].mxu0 %v1146
    %v1217 = vpop.f32.mrb[0].mxu0
    %v1218 = vadd.f32 0.0, %v1217
    %v1219 = vpop.f32.mrb[0].mxu0
    %1220 = vmatprep.mubr.f32.mxu0 0.0
    %1221 = vmatmul.mubr.f32.gmra.mrb[0].mxu0 %v1149
    %v1222 = vpop.f32.mrb[0].mxu0
    %v1223 = vadd.f32 0.0, %v1222
    %v1224 = vpop.f32.mrb[0].mxu0
    %1225 = vdwg.mxu0
    %1226 = vst.msk [vmem:[#allocation2] sm:$0xff] %vm150, %v1218
    %1227 = vst.msk [vmem:[#allocation2 + $0x8] sm:$0xff] %vm150, %v1223
    %1228 = vrot.lane.b32.xlu0 %v1018, 112
    %v1229 = vpop.permute.xlu0 %1228
    %1230 = vrot.lane.b32.xlu0 %v1023, 112
    %v1231 = vpop.permute.xlu0 %1230
    %1232 = vrot.lane.b32.xlu0 %v1018, 80
    %v1233 = vpop.permute.xlu0 %1232
    %1234 = vrot.lane.b32.xlu0 %v1023, 80
    %v1235 = vpop.permute.xlu0 %1234
    %v1236 = vsel %vm150, %v1229, 0
    %v1238 = vsel %vm150, %v1231, 0
    %v1240 = vsel %vm150, %v1233, 0
    %v1242 = vsel %vm150, %v1235, 0
    %1244 = vmatprep.subr.mxu0 0.0
    %1245 = vmatpush1.xpose.msra.mxu0 %v1240
    %1246 = vmatprep.subr.mxu0 0.0
    %1247 = vmatpush1.xpose.msra.mxu0 %v1242
    %1248 = vmatprep.subr.mxu0 0.0
    %1249 = vmatpush1.xpose.msra.mxu0 0.0
    %1250 = vmatprep.subr.mxu0 0.0
    %1251 = vmatpush1.xpose.msra.mxu0 0.0
    %1252 = vmatprep.subr.mxu0 0.0
    %1253 = vmatpush1.xpose.msra.mxu0 0.0
    %1254 = vmatprep.subr.mxu0 0.0
    %1255 = vmatpush1.xpose.msra.mxu0 0.0
    %1256 = vmatprep.subr.mxu0 0.0
    %1257 = vmatpush1.xpose.msra.mxu0 0.0
    %1258 = vmatprep.subr.mxu0 0.0
    %1259 = vmatpush1.xpose.msra.mxu0 0.0
    %1260 = vmatprep.subr.mxu0 0.0
    %1261 = vmatpush1.xpose.msra.mxu0 0.0
    %1262 = vmatprep.subr.mxu0 0.0
    %1263 = vmatpush1.xpose.msra.mxu0 0.0
    %1264 = vmatprep.subr.mxu0 0.0
    %1265 = vmatpush1.xpose.msra.mxu0 0.0
    %1266 = vmatprep.subr.mxu0 0.0
    %1267 = vmatpush1.xpose.msra.mxu0 0.0
    %1268 = vmatprep.subr.mxu0 0.0
    %1269 = vmatpush1.xpose.msra.mxu0 0.0
    %1270 = vmatprep.subr.mxu0 0.0
    %1271 = vmatpush1.xpose.msra.mxu0 0.0
    %1272 = vmatprep.subr.mxu0 0.0
    %1273 = vmatpush1.xpose.msra.mxu0 0.0
    %1274 = vmatprep.subr.mxu0 0.0
    %1275 = vmatpush1.xpose.msra.mxu0 0.0
    %1276 = vmatprep.subr.mxu0 0.0
    %1277 = vmatpush1.xpose.msra.mxu0 0.0
    %1278 = vmatprep.subr.mxu0 0.0
    %1279 = vmatpush1.xpose.msra.mxu0 0.0
    %1280 = vmatprep.subr.mxu0 0.0
    %1281 = vmatpush1.xpose.msra.mxu0 0.0
    %1282 = vmatprep.subr.mxu0 0.0
    %1283 = vmatpush1.xpose.msra.mxu0 0.0
    %1284 = vmatprep.subr.mxu0 0.0
    %1285 = vmatpush1.xpose.msra.mxu0 0.0
    %1286 = vmatprep.subr.mxu0 0.0
    %1287 = vmatpush1.xpose.msra.mxu0 0.0
    %1288 = vmatprep.subr.mxu0 0.0
    %1289 = vmatpush1.xpose.msra.mxu0 0.0
    %1290 = vmatprep.subr.mxu0 0.0
    %1291 = vmatpush1.xpose.msra.mxu0 0.0
    %1292 = vmatprep.subr.mxu0 0.0
    %1293 = vmatpush1.xpose.msra.mxu0 0.0
    %1294 = vmatprep.subr.mxu0 0.0
    %1295 = vmatpush1.xpose.msra.mxu0 0.0
    %1296 = vmatprep.subr.mxu0 0.0
    %1297 = vmatpush1.xpose.msra.mxu0 0.0
    %1298 = vmatprep.subr.mxu0 0.0
    %1299 = vmatpush1.xpose.msra.mxu0 0.0
    %1300 = vmatprep.subr.mxu0 0.0
    %1301 = vmatpush1.xpose.msra.mxu0 0.0
    %1302 = vmatprep.subr.mxu0 0.0
    %1303 = vmatpush1.xpose.msra.mxu0 0.0
    %1304 = vmatprep.subr.mxu0 0.0
    %1305 = vmatpush1.xpose.msra.mxu0 0.0
    %1306 = vmatprep.subr.mxu0 0.0
    %1307 = vmatpush1.xpose.msra.mxu0 0.0
    %1308 = vmatprep.mubr.f32.mxu0 0.0
    %1309 = vmatmul.mubr.f32.gmra.mrb[0].mxu0 %v1236
    %v1310 = vpop.f32.mrb[0].mxu0
    %v1311 = vadd.f32 %v48, %v1310
    %v1312 = vpop.f32.mrb[0].mxu0
    %1313 = vmatprep.mubr.f32.mxu0 0.0
    %1314 = vmatmul.mubr.f32.gmra.mrb[0].mxu0 %v1238
    %v1315 = vpop.f32.mrb[0].mxu0
    %v1316 = vadd.f32 %v49, %v1315
    %v1317 = vpop.f32.mrb[0].mxu0
    %1318 = vdwg.mxu0
    %v1319 = vsel %vm150, %v1311, -inf
    %1320 = vmax.xlane.f32.xlu0 %v1319
    %v1321 = vpop.xlane.xlu0 %1320
    %v1322 = vsel %vm150, %v1316, -inf
    %1323 = vmax.xlane.f32.xlu0 %v1322
    %v1324 = vpop.xlane.xlu0 %1323
    %v1325 = vsub.f32 %v1311, %v1321
    %v1326 = vsub.f32 %v1316, %v1324
    %v1327 = vmul.f32 %v1325, 1.442695
    %v1328 = vpow.pop %v1327
    %v1329 = vmul.f32 %v1326, 1.442695
    %v1330 = vpow.pop %v1329
    %v1331 = vsel %vm150, %v1328, 0.0
    %1332 = vadd.xlane.f32.xlu0 %v1331
    %v1333 = vpop.xlane.xlu0 %1332
    %v1334 = vsel %vm150, %v1330, 0.0
    %1335 = vadd.xlane.f32.xlu0 %v1334
    %v1336 = vpop.xlane.xlu0 %1335
    %v1337 = vrcp.pop %v1333
    %v1338 = vrcp.pop %v1336
    %v1339 = vmul.f32 %v1328, %v1337
    %v1340 = vmul.f32 %v1330, %v1338
    %1341 = vrot.lane.b32.xlu0 %v1018, 48
    %v1342 = vpop.permute.xlu0 %1341
    %1343 = vrot.lane.b32.xlu0 %v1023, 48
    %v1344 = vpop.permute.xlu0 %1343
    %v1348 = vsel %vm150, %v1339, 0
    %v1351 = vsel %vm150, %v1340, 0
    %1353 = vmatprep.subr.mxu0 0.0
    %1354 = vmatpush1.msra.mxu0 %v1342
    %1355 = vmatprep.subr.mxu0 0.0
    %1356 = vmatpush1.msra.mxu0 %v1344
    %1357 = vmatprep.subr.mxu0 0.0
    %1358 = vmatpush1.msra.mxu0 0.0
    %1359 = vmatprep.subr.mxu0 0.0
    %1360 = vmatpush1.msra.mxu0 0.0
    %1361 = vmatprep.subr.mxu0 0.0
    %1362 = vmatpush1.msra.mxu0 0.0
    %1363 = vmatprep.subr.mxu0 0.0
    %1364 = vmatpush1.msra.mxu0 0.0
    %1365 = vmatprep.subr.mxu0 0.0
    %1366 = vmatpush1.msra.mxu0 0.0
    %1367 = vmatprep.subr.mxu0 0.0
    %1368 = vmatpush1.msra.mxu0 0.0
    %1369 = vmatprep.subr.mxu0 0.0
    %1370 = vmatpush1.msra.mxu0 0.0
    %1371 = vmatprep.subr.mxu0 0.0
    %1372 = vmatpush1.msra.mxu0 0.0
    %1373 = vmatprep.subr.mxu0 0.0
    %1374 = vmatpush1.msra.mxu0 0.0
    %1375 = vmatprep.subr.mxu0 0.0
    %1376 = vmatpush1.msra.mxu0 0.0
    %1377 = vmatprep.subr.mxu0 0.0
    %1378 = vmatpush1.msra.mxu0 0.0
    %1379 = vmatprep.subr.mxu0 0.0
    %1380 = vmatpush1.msra.mxu0 0.0
    %1381 = vmatprep.subr.mxu0 0.0
    %1382 = vmatpush1.msra.mxu0 0.0
    %1383 = vmatprep.subr.mxu0 0.0
    %1384 = vmatpush1.msra.mxu0 0.0
    %1385 = vmatprep.subr.mxu0 0.0
    %1386 = vmatpush1.msra.mxu0 0.0
    %1387 = vmatprep.subr.mxu0 0.0
    %1388 = vmatpush1.msra.mxu0 0.0
    %1389 = vmatprep.subr.mxu0 0.0
    %1390 = vmatpush1.msra.mxu0 0.0
    %1391 = vmatprep.subr.mxu0 0.0
    %1392 = vmatpush1.msra.mxu0 0.0
    %1393 = vmatprep.subr.mxu0 0.0
    %1394 = vmatpush1.msra.mxu0 0.0
    %1395 = vmatprep.subr.mxu0 0.0
    %1396 = vmatpush1.msra.mxu0 0.0
    %1397 = vmatprep.subr.mxu0 0.0
    %1398 = vmatpush1.msra.mxu0 0.0
    %1399 = vmatprep.subr.mxu0 0.0
    %1400 = vmatpush1.msra.mxu0 0.0
    %1401 = vmatprep.subr.mxu0 0.0
    %1402 = vmatpush1.msra.mxu0 0.0
    %1403 = vmatprep.subr.mxu0 0.0
    %1404 = vmatpush1.msra.mxu0 0.0
    %1405 = vmatprep.subr.mxu0 0.0
    %1406 = vmatpush1.msra.mxu0 0.0
    %1407 = vmatprep.subr.mxu0 0.0
    %1408 = vmatpush1.msra.mxu0 0.0
    %1409 = vmatprep.subr.mxu0 0.0
    %1410 = vmatpush1.msra.mxu0 0.0
    %1411 = vmatprep.subr.mxu0 0.0
    %1412 = vmatpush1.msra.mxu0 0.0
    %1413 = vmatprep.subr.mxu0 0.0
    %1414 = vmatpush1.msra.mxu0 0.0
    %1415 = vmatprep.subr.mxu0 0.0
    %1416 = vmatpush1.msra.mxu0 0.0
    %1417 = vmatprep.mubr.f32.mxu0 0.0
    %1418 = vmatmul.mubr.f32.gmra.mrb[0].mxu0 %v1348
    %v1419 = vpop.f32.mrb[0].mxu0
    %v1420 = vadd.f32 0.0, %v1419
    %v1421 = vpop.f32.mrb[0].mxu0
    %1422 = vmatprep.mubr.f32.mxu0 0.0
    %1423 = vmatmul.mubr.f32.gmra.mrb[0].mxu0 %v1351
    %v1424 = vpop.f32.mrb[0].mxu0
    %v1425 = vadd.f32 0.0, %v1424
    %v1426 = vpop.f32.mrb[0].mxu0
    %1427 = vdwg.mxu0
    %1430 = vrot.lane.b32.xlu0 %v1420, 16
    %v1431 = vpop.permute.xlu0 %1430
    %1432 = vrot.lane.b32.xlu0 %v1425, 16
    %v1433 = vpop.permute.xlu0 %1432
    %1436 = vst.msk [vmem:[#allocation2] sm:$0xff] %vm553, %v1431
    %1437 = vst.msk [vmem:[#allocation2 + $0x8] sm:$0xff] %vm553, %v1433
    %v1438 = vld [vmem:[#allocation2] sm:$0xff]
    %v1439 = vld [vmem:[#allocation2 + $0x8] sm:$0xff]
    %s1440 = scalar_lea.vmem %s5, 32
    %v1441 = vld [vmem:[%s1440] sm:$0xff]
    %v1442 = vld [vmem:[%s1440 + $0x8] sm:$0xff]
    %v1443 = vld [vmem:[%s1440 + $0x10] sm:$0xff]
    %v1444 = vld [vmem:[%s1440 + $0x18] sm:$0xff]
    %v1445 = vlaneseq
    %v1446 = vshrl.u32 %v1445, 7
    %v1447 = vsub.s32 0, %v1446
    %v1448 = vrot.slane %v1027, %v1447
    %v1450 = vsel %vm61, %v1438, 0
    %v1453 = vsel %vm61, %v1439, 0
    %1455 = vmatprep.subr.mxu0 0.0
    %1456 = vmatpush1.msra.mxu0 %v1441
    %1457 = vmatprep.subr.mxu0 0.0
    %1458 = vmatpush1.msra.mxu0 %v1442
    %1459 = vmatprep.subr.mxu0 0.0
    %1460 = vmatpush1.msra.mxu0 %v1443
    %1461 = vmatprep.subr.mxu0 0.0
    %1462 = vmatpush1.msra.mxu0 %v1444
    %1463 = vmatprep.subr.mxu0 0.0
    %1464 = vmatpush1.msra.mxu0 0.0
    %1465 = vmatprep.subr.mxu0 0.0
    %1466 = vmatpush1.msra.mxu0 0.0
    %1467 = vmatprep.subr.mxu0 0.0
    %1468 = vmatpush1.msra.mxu0 0.0
    %1469 = vmatprep.subr.mxu0 0.0
    %1470 = vmatpush1.msra.mxu0 0.0
    %1471 = vmatprep.subr.mxu0 0.0
    %1472 = vmatpush1.msra.mxu0 0.0
    %1473 = vmatprep.subr.mxu0 0.0
    %1474 = vmatpush1.msra.mxu0 0.0
    %1475 = vmatprep.subr.mxu0 0.0
    %1476 = vmatpush1.msra.mxu0 0.0
    %1477 = vmatprep.subr.mxu0 0.0
    %1478 = vmatpush1.msra.mxu0 0.0
    %1479 = vmatprep.subr.mxu0 0.0
    %1480 = vmatpush1.msra.mxu0 0.0
    %1481 = vmatprep.subr.mxu0 0.0
    %1482 = vmatpush1.msra.mxu0 0.0
    %1483 = vmatprep.subr.mxu0 0.0
    %1484 = vmatpush1.msra.mxu0 0.0
    %1485 = vmatprep.subr.mxu0 0.0
    %1486 = vmatpush1.msra.mxu0 0.0
    %1487 = vmatprep.subr.mxu0 0.0
    %1488 = vmatpush1.msra.mxu0 0.0
    %1489 = vmatprep.subr.mxu0 0.0
    %1490 = vmatpush1.msra.mxu0 0.0
    %1491 = vmatprep.subr.mxu0 0.0
    %1492 = vmatpush1.msra.mxu0 0.0
    %1493 = vmatprep.subr.mxu0 0.0
    %1494 = vmatpush1.msra.mxu0 0.0
    %1495 = vmatprep.subr.mxu0 0.0
    %1496 = vmatpush1.msra.mxu0 0.0
    %1497 = vmatprep.subr.mxu0 0.0
    %1498 = vmatpush1.msra.mxu0 0.0
    %1499 = vmatprep.subr.mxu0 0.0
    %1500 = vmatpush1.msra.mxu0 0.0
    %1501 = vmatprep.subr.mxu0 0.0
    %1502 = vmatpush1.msra.mxu0 0.0
    %1503 = vmatprep.subr.mxu0 0.0
    %1504 = vmatpush1.msra.mxu0 0.0
    %1505 = vmatprep.subr.mxu0 0.0
    %1506 = vmatpush1.msra.mxu0 0.0
    %1507 = vmatprep.subr.mxu0 0.0
    %1508 = vmatpush1.msra.mxu0 0.0
    %1509 = vmatprep.subr.mxu0 0.0
    %1510 = vmatpush1.msra.mxu0 0.0
    %1511 = vmatprep.subr.mxu0 0.0
    %1512 = vmatpush1.msra.mxu0 0.0
    %1513 = vmatprep.subr.mxu0 0.0
    %1514 = vmatpush1.msra.mxu0 0.0
    %1515 = vmatprep.subr.mxu0 0.0
    %1516 = vmatpush1.msra.mxu0 0.0
    %1517 = vmatprep.subr.mxu0 0.0
    %1518 = vmatpush1.msra.mxu0 0.0
    %1519 = vmatprep.mubr.f32.mxu0 0.0
    %1520 = vmatmul.mubr.f32.gmra.mrb[0].mxu0 %v1450
    %v1521 = vpop.f32.mrb[0].mxu0
    %v1522 = vadd.f32 %v1448, %v1521
    %v1523 = vpop.f32.mrb[0].mxu0
    %1524 = vmatprep.mubr.f32.mxu0 0.0
    %1525 = vmatmul.mubr.f32.gmra.mrb[0].mxu0 %v1453
    %v1526 = vpop.f32.mrb[0].mxu0
    %v1527 = vadd.f32 %v1448, %v1526
    %v1528 = vpop.f32.mrb[0].mxu0
    %1529 = vdwg.mxu0
    %v1530 = vadd.f32 %v930, %v1522
    %v1531 = vadd.f32 %v931, %v1527
    %v1532 = vsel %vm61, %v1530, 0.0
    %1533 = vadd.xlane.f32.xlu0 %v1532
    %v1534 = vpop.xlane.xlu0 %1533
    %v1535 = vsel %vm61, %v1531, 0.0
    %1536 = vadd.xlane.f32.xlu0 %v1535
    %v1537 = vpop.xlane.xlu0 %1536
    %v1538 = vmul.f32 %v1534, %v655
    %v1539 = vmul.f32 %v1537, %v655
    %v1540 = vsub.f32 %v1530, %v1538
    %v1541 = vsub.f32 %v1531, %v1539
    %v1542 = vmul.f32 %v1540, %v1540
    %v1543 = vmul.f32 %v1541, %v1541
    %v1544 = vsel %vm61, %v1542, 0.0
    %1545 = vadd.xlane.f32.xlu0 %v1544
    %v1546 = vpop.xlane.xlu0 %1545
    %v1547 = vsel %vm61, %v1543, 0.0
    %1548 = vadd.xlane.f32.xlu0 %v1547
    %v1549 = vpop.xlane.xlu0 %1548
    %v1550 = vmul.f32 %v1546, %v655
    %v1551 = vmul.f32 %v1549, %v655
    %v1552 = vadd.f32 %v1550, 1e-06
    %v1553 = vadd.f32 %v1551, 1e-06
    %v1554 = vrsqrt.pop %v1552
    %v1555 = vrsqrt.pop %v1553
    %v1556 = vmul.f32 %v1540, %v1554
    %v1557 = vmul.f32 %v1541, %v1555
    %v1558 = vlaneseq
    %v1559 = vshrl.u32 %v1558, 7
    %v1560 = vsub.s32 2, %v1559
    %v1561 = vrot.slane %v1027, %v1560
    %v1562 = vmul.f32 %v1556, %v1561
    %v1563 = vmul.f32 %v1557, %v1561
    %v1564 = vlaneseq
    %v1565 = vshrl.u32 %v1564, 7
    %v1566 = vsub.s32 3, %v1565
    %v1567 = vrot.slane %v1027, %v1566
    %v1568 = vadd.f32 %v1562, %v1567
    %v1569 = vadd.f32 %v1563, %v1567
    %s1570 = scalar_lea.vmem %s6, 32
    %v1571 = vld [vmem:[%s1570] sm:$0xff]
    %v1572 = vld [vmem:[%s1570 + $0x8] sm:$0xff]
    %v1573 = vld [vmem:[%s1570 + $0x10] sm:$0xff]
    %v1574 = vld [vmem:[%s1570 + $0x18] sm:$0xff]
    %s1575 = scalar_lea.vmem %s7, 1
    %v1576 = vld [vmem:[%s1575] sm:$0x1]
    %v1578 = vlaneseq
    %v1579 = vshrl.u32 %v1578, 7
    %v1580 = vsub.s32 0, %v1579
    %v1581 = vrot.slane %v1576, %v1580
    %v1584 = vsel %vm61, %v1568, 0
    %v1587 = vsel %vm61, %v1569, 0
    %1589 = vmatprep.subr.mxu0 0.0
    %1590 = vmatpush1.msra.mxu0 %v1571
    %1591 = vmatprep.subr.mxu0 0.0
    %1592 = vmatpush1.msra.mxu0 %v1572
    %1593 = vmatprep.subr.mxu0 0.0
    %1594 = vmatpush1.msra.mxu0 %v1573
    %1595 = vmatprep.subr.mxu0 0.0
    %1596 = vmatpush1.msra.mxu0 %v1574
    %1597 = vmatprep.subr.mxu0 0.0
    %1598 = vmatpush1.msra.mxu0 0.0
    %1599 = vmatprep.subr.mxu0 0.0
    %1600 = vmatpush1.msra.mxu0 0.0
    %1601 = vmatprep.subr.mxu0 0.0
    %1602 = vmatpush1.msra.mxu0 0.0
    %1603 = vmatprep.subr.mxu0 0.0
    %1604 = vmatpush1.msra.mxu0 0.0
    %1605 = vmatprep.subr.mxu0 0.0
    %1606 = vmatpush1.msra.mxu0 0.0
    %1607 = vmatprep.subr.mxu0 0.0
    %1608 = vmatpush1.msra.mxu0 0.0
    %1609 = vmatprep.subr.mxu0 0.0
    %1610 = vmatpush1.msra.mxu0 0.0
    %1611 = vmatprep.subr.mxu0 0.0
    %1612 = vmatpush1.msra.mxu0 0.0
    %1613 = vmatprep.subr.mxu0 0.0
    %1614 = vmatpush1.msra.mxu0 0.0
    %1615 = vmatprep.subr.mxu0 0.0
    %1616 = vmatpush1.msra.mxu0 0.0
    %1617 = vmatprep.subr.mxu0 0.0
    %1618 = vmatpush1.msra.mxu0 0.0
    %1619 = vmatprep.subr.mxu0 0.0
    %1620 = vmatpush1.msra.mxu0 0.0
    %1621 = vmatprep.subr.mxu0 0.0
    %1622 = vmatpush1.msra.mxu0 0.0
    %1623 = vmatprep.subr.mxu0 0.0
    %1624 = vmatpush1.msra.mxu0 0.0
    %1625 = vmatprep.subr.mxu0 0.0
    %1626 = vmatpush1.msra.mxu0 0.0
    %1627 = vmatprep.subr.mxu0 0.0
    %1628 = vmatpush1.msra.mxu0 0.0
    %1629 = vmatprep.subr.mxu0 0.0
    %1630 = vmatpush1.msra.mxu0 0.0
    %1631 = vmatprep.subr.mxu0 0.0
    %1632 = vmatpush1.msra.mxu0 0.0
    %1633 = vmatprep.subr.mxu0 0.0
    %1634 = vmatpush1.msra.mxu0 0.0
    %1635 = vmatprep.subr.mxu0 0.0
    %1636 = vmatpush1.msra.mxu0 0.0
    %1637 = vmatprep.subr.mxu0 0.0
    %1638 = vmatpush1.msra.mxu0 0.0
    %1639 = vmatprep.subr.mxu0 0.0
    %1640 = vmatpush1.msra.mxu0 0.0
    %1641 = vmatprep.subr.mxu0 0.0
    %1642 = vmatpush1.msra.mxu0 0.0
    %1643 = vmatprep.subr.mxu0 0.0
    %1644 = vmatpush1.msra.mxu0 0.0
    %1645 = vmatprep.subr.mxu0 0.0
    %1646 = vmatpush1.msra.mxu0 0.0
    %1647 = vmatprep.subr.mxu0 0.0
    %1648 = vmatpush1.msra.mxu0 0.0
    %1649 = vmatprep.subr.mxu0 0.0
    %1650 = vmatpush1.msra.mxu0 0.0
    %1651 = vmatprep.subr.mxu0 0.0
    %1652 = vmatpush1.msra.mxu0 0.0
    %1653 = vmatprep.mubr.f32.mxu0 0.0
    %1654 = vmatmul.mubr.f32.gmra.mrb[0].mxu0 %v1584
    %v1655 = vpop.f32.mrb[0].mxu0
    %v1656 = vadd.f32 %v1581, %v1655
    %v1657 = vpop.f32.mrb[0].mxu0
    %1658 = vmatprep.mubr.f32.mxu0 0.0
    %1659 = vmatmul.mubr.f32.gmra.mrb[0].mxu0 %v1587
    %v1660 = vpop.f32.mrb[0].mxu0
    %v1661 = vadd.f32 %v1581, %v1660
    %v1662 = vpop.f32.mrb[0].mxu0
    %1663 = vdwg.mxu0
    %v1664 = vmul.f32 %v1656, %v1656
    %v1665 = vmul.f32 %v1661, %v1661
    %v1666 = vmul.f32 %v1656, %v1664
    %v1667 = vmul.f32 %v1661, %v1665
    %v1668 = vmul.f32 %v1666, 0.044715
    %v1669 = vmul.f32 %v1667, 0.044715
    %v1670 = vadd.f32 %v1656, %v1668
    %v1671 = vadd.f32 %v1661, %v1669
    %v1672 = vmul.f32 %v1670, 0.7978846
    %v1673 = vmul.f32 %v1671, 0.7978846
    %v1674 = vtanh.pop %v1672
    %v1675 = vtanh.pop %v1673
    %v1676 = vadd.f32 %v1674, 1.0
    %v1677 = vadd.f32 %v1675, 1.0
    %v1678 = vmul.f32 %v1676, 0.5
    %v1679 = vmul.f32 %v1677, 0.5
    %v1680 = vmul.f32 %v1656, %v1678
    %v1681 = vmul.f32 %v1661, %v1679
    %s1682 = scalar_lea.vmem %s8, 64
    %v1683 = vld [vmem:[%s1682] sm:$0xff]
    %v1684 = vld [vmem:[%s1682 + $0x8] sm:$0xff]
    %v1685 = vld [vmem:[%s1682 + $0x10] sm:$0xff]
    %v1686 = vld [vmem:[%s1682 + $0x18] sm:$0xff]
    %v1687 = vld [vmem:[%s1682 + $0x20] sm:$0xff]
    %v1688 = vld [vmem:[%s1682 + $0x28] sm:$0xff]
    %v1689 = vld [vmem:[%s1682 + $0x30] sm:$0xff]
    %v1690 = vld [vmem:[%s1682 + $0x38] sm:$0xff]
    %v1691 = vlaneseq
    %v1692 = vshrl.u32 %v1691, 7
    %v1693 = vsub.s32 1, %v1692
    %v1694 = vrot.slane %v1027, %v1693
    %v1696 = vsel %vm810, %v1680, 0
    %v1699 = vsel %vm810, %v1681, 0
    %1701 = vmatprep.subr.mxu0 0.0
    %1702 = vmatpush1.msra.mxu0 %v1683
    %1703 = vmatprep.subr.mxu0 0.0
    %1704 = vmatpush1.msra.mxu0 %v1684
    %1705 = vmatprep.subr.mxu0 0.0
    %1706 = vmatpush1.msra.mxu0 %v1685
    %1707 = vmatprep.subr.mxu0 0.0
    %1708 = vmatpush1.msra.mxu0 %v1686
    %1709 = vmatprep.subr.mxu0 0.0
    %1710 = vmatpush1.msra.mxu0 %v1687
    %1711 = vmatprep.subr.mxu0 0.0
    %1712 = vmatpush1.msra.mxu0 %v1688
    %1713 = vmatprep.subr.mxu0 0.0
    %1714 = vmatpush1.msra.mxu0 %v1689
    %1715 = vmatprep.subr.mxu0 0.0
    %1716 = vmatpush1.msra.mxu0 %v1690
    %1717 = vmatprep.subr.mxu0 0.0
    %1718 = vmatpush1.msra.mxu0 0.0
    %1719 = vmatprep.subr.mxu0 0.0
    %1720 = vmatpush1.msra.mxu0 0.0
    %1721 = vmatprep.subr.mxu0 0.0
    %1722 = vmatpush1.msra.mxu0 0.0
    %1723 = vmatprep.subr.mxu0 0.0
    %1724 = vmatpush1.msra.mxu0 0.0
    %1725 = vmatprep.subr.mxu0 0.0
    %1726 = vmatpush1.msra.mxu0 0.0
    %1727 = vmatprep.subr.mxu0 0.0
    %1728 = vmatpush1.msra.mxu0 0.0
    %1729 = vmatprep.subr.mxu0 0.0
    %1730 = vmatpush1.msra.mxu0 0.0
    %1731 = vmatprep.subr.mxu0 0.0
    %1732 = vmatpush1.msra.mxu0 0.0
    %1733 = vmatprep.subr.mxu0 0.0
    %1734 = vmatpush1.msra.mxu0 0.0
    %1735 = vmatprep.subr.mxu0 0.0
    %1736 = vmatpush1.msra.mxu0 0.0
    %1737 = vmatprep.subr.mxu0 0.0
    %1738 = vmatpush1.msra.mxu0 0.0
    %1739 = vmatprep.subr.mxu0 0.0
    %1740 = vmatpush1.msra.mxu0 0.0
    %1741 = vmatprep.subr.mxu0 0.0
    %1742 = vmatpush1.msra.mxu0 0.0
    %1743 = vmatprep.subr.mxu0 0.0
    %1744 = vmatpush1.msra.mxu0 0.0
    %1745 = vmatprep.subr.mxu0 0.0
    %1746 = vmatpush1.msra.mxu0 0.0
    %1747 = vmatprep.subr.mxu0 0.0
    %1748 = vmatpush1.msra.mxu0 0.0
    %1749 = vmatprep.subr.mxu0 0.0
    %1750 = vmatpush1.msra.mxu0 0.0
    %1751 = vmatprep.subr.mxu0 0.0
    %1752 = vmatpush1.msra.mxu0 0.0
    %1753 = vmatprep.subr.mxu0 0.0
    %1754 = vmatpush1.msra.mxu0 0.0
    %1755 = vmatprep.subr.mxu0 0.0
    %1756 = vmatpush1.msra.mxu0 0.0
    %1757 = vmatprep.subr.mxu0 0.0
    %1758 = vmatpush1.msra.mxu0 0.0
    %1759 = vmatprep.subr.mxu0 0.0
    %1760 = vmatpush1.msra.mxu0 0.0
    %1761 = vmatprep.subr.mxu0 0.0
    %1762 = vmatpush1.msra.mxu0 0.0
    %1763 = vmatprep.subr.mxu0 0.0
    %1764 = vmatpush1.msra.mxu0 0.0
    %1765 = vmatprep.mubr.f32.mxu0 0.0
    %1766 = vmatmul.mubr.f32.gmra.mrb[0].mxu0 %v1696
    %v1767 = vpop.f32.mrb[0].mxu0
    %v1768 = vadd.f32 %v1694, %v1767
    %v1769 = vpop.f32.mrb[0].mxu0
    %1770 = vmatprep.mubr.f32.mxu0 0.0
    %1771 = vmatmul.mubr.f32.gmra.mrb[0].mxu0 %v1699
    %v1772 = vpop.f32.mrb[0].mxu0
    %v1773 = vadd.f32 %v1694, %v1772
    %v1774 = vpop.f32.mrb[0].mxu0
    %1775 = vdwg.mxu0
    %v1776 = vadd.f32 %v1568, %v1768
    %v1777 = vadd.f32 %v1569, %v1773
    %v1778 = vsel %vm61, %v1776, 0.0
    %1779 = vadd.xlane.f32.xlu0 %v1778
    %v1780 = vpop.xlane.xlu0 %1779
    %v1781 = vsel %vm61, %v1777, 0.0
    %1782 = vadd.xlane.f32.xlu0 %v1781
    %v1783 = vpop.xlane.xlu0 %1782
    %v1784 = vmul.f32 %v1780, %v655
    %v1785 = vmul.f32 %v1783, %v655
    %v1786 = vsub.f32 %v1776, %v1784
    %v1787 = vsub.f32 %v1777, %v1785
    %v1788 = vmul.f32 %v1786, %v1786
    %v1789 = vmul.f32 %v1787, %v1787
    %v1790 = vsel %vm61, %v1788, 0.0
    %1791 = vadd.xlane.f32.xlu0 %v1790
    %v1792 = vpop.xlane.xlu0 %1791
    %v1793 = vsel %vm61, %v1789, 0.0
    %1794 = vadd.xlane.f32.xlu0 %v1793
    %v1795 = vpop.xlane.xlu0 %1794
    %v1796 = vmul.f32 %v1792, %v655
    %v1797 = vmul.f32 %v1795, %v655
    %v1798 = vadd.f32 %v1796, 1e-06
    %v1799 = vadd.f32 %v1797, 1e-06
    %v1800 = vrsqrt.pop %v1798
    %v1801 = vrsqrt.pop %v1799
    %v1802 = vmul.f32 %v1786, %v1800
    %v1803 = vmul.f32 %v1787, %v1801
    %v1804 = vlaneseq
    %v1805 = vshrl.u32 %v1804, 7
    %v1806 = vsub.s32 4, %v1805
    %v1807 = vrot.slane %v1027, %v1806
    %v1808 = vmul.f32 %v1802, %v1807
    %v1809 = vmul.f32 %v1803, %v1807
    %v1810 = vlaneseq
    %v1811 = vshrl.u32 %v1810, 7
    %v1812 = vsub.s32 5, %v1811
    %v1813 = vrot.slane %v1027, %v1812
    %v1814 = vadd.f32 %v1808, %v1813
    %v1815 = vadd.f32 %v1809, %v1813
    %v1816 = vld [vmem:[%s10] sm:$0x1]
    %v1818 = vlaneseq
    %v1819 = vshrl.u32 %v1818, 7
    %v1820 = vsub.s32 0, %v1819
    %v1821 = vrot.slane %v1816, %v1820
    %v1823 = vmul.f32 %v1814, %v1821
    %v1824 = vmul.f32 %v1815, %v1821
    %v1825 = vsel %vm61, %v1823, 0.0
    %1826 = vadd.xlane.f32.xlu0 %v1825
    %v1827 = vpop.xlane.xlu0 %1826
    %v1828 = vsel %vm61, %v1824, 0.0
    %1829 = vadd.xlane.f32.xlu0 %v1828
    %v1830 = vpop.xlane.xlu0 %1829
    %v1831 = vld [vmem:[#allocation3] sm:$0x1]
    %v1833 = vlaneseq
    %v1834 = vshrl.u32 %v1833, 7
    %v1835 = vsub.s32 0, %v1834
    %v1836 = vrot.slane %v1831, %v1835
    %v1838 = vadd.f32 %v1827, %v1836
    %v1839 = vadd.f32 %v1830, %v1836
    %v1840 = vxor.u32 %v1838, 2147483648
    %v1841 = vxor.u32 %v1839, 2147483648
    %v1842 = vmul.f32 %v1840, 1.442695
    %v1843 = vpow.pop %v1842
    %v1844 = vmul.f32 %v1841, 1.442695
    %v1845 = vpow.pop %v1844
    %v1846 = vadd.f32 %v1843, 1.0
    %v1847 = vadd.f32 %v1845, 1.0
    %v1848 = vrcp.pop %v1846
    %v1849 = vmul.f32 1.0, %v1848
    %v1850 = vrcp.pop %v1847
    %v1851 = vmul.f32 1.0, %v1850
    %vm1852 = vcmask 7168
    %1853 = vst.msk [vmem:[%s12] sm:$0xff] %vm1852, %v1849
    %1854 = vst.msk [vmem:[%s12 + $0x8] sm:$0xff] %vm1852, %v1851
    %v1855 = vld [vmem:[%s2] sm:$0xff]
    %v1856 = vld [vmem:[%s2 + $0x8] sm:$0xff]
    %v1857 = vmax.f32 %v1838, 0.0
    %v1858 = vmax.f32 %v1839, 0.0
    %v1859 = vmul.f32 %v1838, %v1855
    %v1860 = vmul.f32 %v1839, %v1856
    %v1861 = vsub.f32 %v1857, %v1859
    %v1862 = vsub.f32 %v1858, %v1860
    %v1863 = vand.u32 2147483647, %v1838
    %v1864 = vand.u32 2147483647, %v1839
    %v1865 = vsub.f32 0.0, %v1863
    %v1866 = vsub.f32 0.0, %v1864
    %v1867 = vmul.f32 %v1865, 1.442695
    %v1868 = vpow.pop %v1867
    %v1869 = vmul.f32 %v1866, 1.442695
    %v1870 = vpow.pop %v1869
    %v1871 = vadd.f32 %v1868, 1.0
    %v1872 = vlog2.pop %v1871
    %v1873 = vmul.f32 %v1872, 0.6931472
    %v1874 = vmul.f32 -0.5, %v1868
    %v1875 = vadd.f32 %v1874, 1.0
    %v1876 = vmul.f32 %v1875, %v1868
    %v1877 = vand.u32 2147483647, %v1868
    %vm1878 = vcmp.lt.f32.partialorder %v1877, 0.0004427343
    %v1879 = vsel %vm1878, %v1876, %v1873
    %v1880 = vadd.f32 %v1870, 1.0
    %v1881 = vlog2.pop %v1880
    %v1882 = vmul.f32 %v1881, 0.6931472
    %v1883 = vmul.f32 -0.5, %v1870
    %v1884 = vadd.f32 %v1883, 1.0
    %v1885 = vmul.f32 %v1884, %v1870
    %v1886 = vand.u32 2147483647, %v1870
    %vm1887 = vcmp.lt.f32.partialorder %v1886, 0.0004427343
    %v1888 = vsel %vm1887, %v1885, %v1882
    %v1889 = vadd.f32 %v1861, %v1879
    %v1890 = vadd.f32 %v1862, %v1888
    %vm1891 = vcmp.ne.f32.partialorder %v1855, -100.0
    %vm1892 = vcmp.ne.f32.partialorder %v1856, -100.0
    %v1893 = vsel %vm1891, 1, 0
    %v1894 = vsel %vm1892, 1, 0
    %v1895 = vcvt.s32.f32 %v1893
    %v1896 = vcvt.s32.f32 %v1894
    %v1897 = vmul.f32 %v1889, %v1895
    %v1898 = vmul.f32 %v1890, %v1896
    %v1899 = vsel %vm1852, %v1897, 0.0
    %v1900 = vsel %vm1852, %v1898, 0.0
    %v1901 = vadd.f32 %v1899, %v1900
    %1902 = vadd.xlane.f32.xlu0 %v1901
    %v1903 = vpop.xlane.xlu0 %1902
    %v1904 = vrot.slane %v1903, 4
    %v1905 = vadd.f32 %v1903, %v1904
    %v1906 = vrot.slane %v1905, 2
    %v1907 = vadd.f32 %v1905, %v1906
    %v1908 = vrot.slane %v1907, 1
    %v1909 = vadd.f32 %v1907, %v1908
    %s1910 = vtos %v1909
    %v1911 = vsel %vm1852, %v1895, 0.0
    %v1912 = vsel %vm1852, %v1896, 0.0
    %v1913 = vadd.f32 %v1911, %v1912
    %1914 = vadd.xlane.f32.xlu0 %v1913
    %v1915 = vpop.xlane.xlu0 %1914
    %v1916 = vrot.slane %v1915, 4
    %v1917 = vadd.f32 %v1915, %v1916
    %v1918 = vrot.slane %v1917, 2
    %v1919 = vadd.f32 %v1917, %v1918
    %v1920 = vrot.slane %v1919, 1
    %v1921 = vadd.f32 %v1919, %v1920
    %s1922 = vtos %v1921
    %s1923 = smax.f32 %s1922, 1.0
    %v1924 = vstv %s1923
    %v1925 = vrcp.pop %v1924
    %s1926 = vtos %v1925
    %s1927 = smul.f32 %s1910, %s1926
    %v1928 = vstv %s1927
    %vm1929 = vcmask 0
    %1930 = vst.msk [vmem:[#allocation4] sm:$0x1] %vm1929, %v1928
    // Predicated region
    $region50: #{nbme_forward.1} parent=1 // pred_check
      _
    $region51: #{nbme_forward.1} parent=1 // pred_check_branch
      %1932 = sbr.rel (0) target = $region53
    $region52: #{nbme_forward.1} parent=1 // pred_region
      _
    $region53: #{nbme_forward.1} parent=1 // pred_fallthru
      _
    // Predicated region
    $region54: #{nbme_forward.1} parent=1 // pred_check
      _
    $region55: #{nbme_forward.1} parent=1 // pred_check_branch
      %1934 = sbr.rel (0) target = $region57
    $region56: #{nbme_forward.1} parent=1 // pred_region
      %s1936 = ssub.s32 16, 16
      %1937 = vsyncadd [#allocation5], %s1936
      %s1939 = sshll.u32 [#allocation4], 4
      %s1940 = int_to_ptr.vmem [resolvable:$true] %s1939
      %1942 = dma.vmem_to_hbm [thread:$0]  %s1940, 16, %s13, [#allocation5]
    $region57: #{nbme_forward.1} parent=1 // pred_fallthru
      _
    // Predicated region
    $region58: #{nbme_forward.1} parent=1 // pred_check
      _
    $region59: #{nbme_forward.1} parent=1 // pred_check_branch
      %1944 = sbr.rel (0) target = $region61
    $region60: #{nbme_forward.1} parent=1 // pred_region
      _
    $region61: #{nbme_forward.1} parent=1 // pred_fallthru
      _
    // Predicated region
    $region62: #{nbme_forward.1} parent=1 // pred_check
      _
    $region63: #{nbme_forward.1} parent=1 // pred_check_branch
      %1946 = sbr.rel (0) target = $region65
    $region64: #{nbme_forward.1} parent=1 // pred_region
      %1947 = dma.done [#allocation5], 16
    $region65: #{nbme_forward.1} parent=1 // pred_fallthru
      _
    %1948 = vsyncpa [#allocation5], 1

</llo_original>
